<compile_context>
chip_gen: v7x
topology: tpu7x:2x2x1
jax: 0.10.0
libtpu: 0.0.40
codegen_flags: <defaults>
</compile_context>

<pallas_src>
import jax
import jax.numpy as jnp
from jax.experimental import pallas as pl
from jax.experimental.pallas import tpu as pltpu


def _round_up(x, m):
    return (x + m - 1) // m * m


def lstm_model_kernel(x_ref, wih_ref, whh_ref, b_ref,
                      w1_ref, b1_ref, w2_ref, b2_ref,
                      out_ref, gx_sc, h_sc, c_sc):
    """One time-chunk of the LSTM + (on the last chunk) the MLP head.

    x_ref   : (t_chunk*Bp, D)  bf16, time-major rows (row = t*Bp + b)
    wih_ref : (D, 4*Hp)        bf16, per-gate lane-aligned blocks (i,f,g,o)
    whh_ref : (Hp, 4*Hp)       bf16
    b_ref   : (1, 4*Hp)        f32  (b_ih + b_hh)
    w1_ref  : (Hp, Fp)         bf16
    b1_ref  : (1, Fp)          f32
    w2_ref  : (Fp, Op)         bf16
    b2_ref  : (1, Op)          f32
    out_ref : (Bp, Op)         f32
    gx_sc   : (t_chunk*Bp, 4*Hp) f32 VMEM  hoisted input-projection buffer
    h_sc, c_sc : (Bp, Hp)      f32 VMEM    recurrent state (carried over grid)
    """
    b_pad, h_pad = h_sc.shape
    t_chunk = x_ref.shape[0] // b_pad

    # Zero the recurrent state on the first time chunk only.
    @pl.when(pl.program_id(0) == 0)
    def _():
        h_sc[...] = jnp.zeros_like(h_sc)
        c_sc[...] = jnp.zeros_like(c_sc)

    # Hoisted input projection for the whole chunk: one MXU matmul, bias folded
    # in once (not re-broadcast every timestep).
    gx_sc[...] = (
        jnp.dot(x_ref[...], wih_ref[...], preferred_element_type=jnp.float32)
        + b_ref[...]
    )

    whh = whh_ref[...]            # loop-invariant (Hp, 4*Hp) bf16
    h = h_sc[...]                 # f32 (Bp, Hp)
    c = c_sc[...]                 # f32 (Bp, Hp)

    # Fully unrolled recurrence over the chunk; the only matmul on the serial
    # chain is (Bp, Hp) @ (Hp, 4*Hp) in bf16 with f32 accumulation.
    for t in range(t_chunk):
        gx_t = gx_sc[pl.ds(t * b_pad, b_pad), :]                    # (Bp, 4*Hp)
        gates = gx_t + jnp.dot(h.astype(jnp.bfloat16), whh,
                               preferred_element_type=jnp.float32)
        # Each gate is a lane-aligned 128-wide block -> full-vreg nonlinearities.
        i_g = jax.nn.sigmoid(gates[:, 0 * h_pad:1 * h_pad])
        f_g = jax.nn.sigmoid(gates[:, 1 * h_pad:2 * h_pad])
        g_g = jnp.tanh(gates[:, 2 * h_pad:3 * h_pad])
        o_g = jax.nn.sigmoid(gates[:, 3 * h_pad:4 * h_pad])
        c = f_g * c + i_g * g_g
        h = o_g * jnp.tanh(c)

    h_sc[...] = h
    c_sc[...] = c

    # Head only on the last time chunk: relu(h_T) -> fc1 -> relu -> fc2.
    # (dropout == identity in eval mode)
    @pl.when(pl.program_id(0) == pl.num_programs(0) - 1)
    def _():
        x_last = jnp.maximum(h, 0.0).astype(jnp.bfloat16)           # relu(h_T)
        z = jnp.dot(x_last, w1_ref[...],
                    preferred_element_type=jnp.float32) + b1_ref[...]
        z = jnp.maximum(z, 0.0).astype(jnp.bfloat16)
        out = jnp.dot(z, w2_ref[...],
                      preferred_element_type=jnp.float32) + b2_ref[...]
        out_ref[...] = out.astype(out_ref.dtype)


def _pack_gate_weights(w, h, h_pad, k, k_pad, dtype):
    """PyTorch gate-stacked weight (4*h, k) -> transposed, padded (k_pad, 4*h_pad)
    with each gate in its own lane-aligned h_pad-wide block (order i,f,g,o)."""
    out = jnp.zeros((k_pad, 4 * h_pad), dtype=dtype)
    for g in range(4):
        blk = w[g * h:(g + 1) * h, :].T.astype(dtype)               # (k, h)
        out = out.at[:k, g * h_pad:g * h_pad + h].set(blk)
    return out


def _pack_gate_bias(b, h, h_pad):
    out = jnp.zeros((1, 4 * h_pad), dtype=jnp.float32)
    for g in range(4):
        out = out.at[0, g * h_pad:g * h_pad + h].set(
            b[g * h:(g + 1) * h].astype(jnp.float32))
    return out


def lstm_model_forward(src, params, *, t_chunk=None):
    """src: (B, T, D) batch-first, same as the PyTorch module."""
    B, T, D = src.shape
    w_ih, w_hh = params["w_ih"], params["w_hh"]
    b_ih, b_hh = params["b_ih"], params["b_hh"]
    w1, b1, w2, b2 = (params["fc1_w"], params["fc1_b"],
                      params["fc2_w"], params["fc2_b"])

    H = w_hh.shape[1]
    F = w1.shape[0]
    O = w2.shape[0]

    B_pad = _round_up(B, 8)          # sublane multiple
    H_pad = _round_up(H, 128)        # lane-aligned per-gate blocks
    F_pad = _round_up(F, 128)
    O_pad = _round_up(O, 128)        # lane-dense output store

    if t_chunk is None:
        t_chunk = min(T, 16)
    t_chunk = max(1, min(t_chunk, T))
    while T % t_chunk:
        t_chunk -= 1
    grid = (T // t_chunk,)

    # Time-major, batch padded to a sublane multiple, flattened so each time
    # chunk is one contiguous (t_chunk*B_pad, D) slab (no in-kernel reshape).
    x = jnp.transpose(src, (1, 0, 2)).astype(jnp.bfloat16)          # (T, B, D)
    if B_pad != B:
        x = jnp.pad(x, ((0, 0), (0, B_pad - B), (0, 0)))
    x2d = x.reshape(T * B_pad, D)

    wih_p = _pack_gate_weights(w_ih, H, H_pad, D, D, jnp.bfloat16)        # (D, 4Hp)
    whh_p = _pack_gate_weights(w_hh, H, H_pad, H, H_pad, jnp.bfloat16)    # (Hp, 4Hp)
    b_p = _pack_gate_bias(b_ih + b_hh, H, H_pad)                          # (1, 4Hp)

    w1_p = jnp.zeros((H_pad, F_pad), jnp.bfloat16).at[:H, :F].set(
        w1.T.astype(jnp.bfloat16))
    b1_p = jnp.zeros((1, F_pad), jnp.float32).at[0, :F].set(
        b1.astype(jnp.float32))
    w2_p = jnp.zeros((F_pad, O_pad), jnp.bfloat16).at[:F, :O].set(
        w2.T.astype(jnp.bfloat16))
    b2_p = jnp.zeros((1, O_pad), jnp.float32).at[0, :O].set(
        b2.astype(jnp.float32))

    def _full_spec(a):
        return pl.BlockSpec(a.shape, lambda ti: (0, 0))

    flops = int(2 * T * B_pad * D * 4 * H_pad          # input projection
                + 2 * T * B_pad * H_pad * 4 * H_pad    # recurrent projection
                + 2 * B_pad * H_pad * F_pad            # fc1
                + 2 * B_pad * F_pad * O_pad)           # fc2
    transcendentals = int(T * B_pad * 5 * H_pad)
    bytes_accessed = int(
        x2d.size * 2
        + (wih_p.size + whh_p.size + w1_p.size + w2_p.size) * 2
        + (b_p.size + b1_p.size + b2_p.size) * 4
        + B_pad * O_pad * 4)

    out = pl.pallas_call(
        lstm_model_kernel,
        out_shape=jax.ShapeDtypeStruct((B_pad, O_pad), jnp.float32),
        grid=grid,
        in_specs=[
            pl.BlockSpec((t_chunk * B_pad, D), lambda ti: (ti, 0)),   # x chunks
            _full_spec(wih_p), _full_spec(whh_p), _full_spec(b_p),
            _full_spec(w1_p), _full_spec(b1_p),
            _full_spec(w2_p), _full_spec(b2_p),
        ],
        out_specs=pl.BlockSpec((B_pad, O_pad), lambda ti: (0, 0)),
        scratch_shapes=[
            pltpu.VMEM((t_chunk * B_pad, 4 * H_pad), jnp.float32),  # gates_x
            pltpu.VMEM((B_pad, H_pad), jnp.float32),                # h
            pltpu.VMEM((B_pad, H_pad), jnp.float32),                # c
        ],
        compiler_params=pltpu.CompilerParams(
            dimension_semantics=("arbitrary",),     # time is a carried recurrence
            vmem_limit_bytes=32 * 1024 * 1024,
        ),
        cost_estimate=pl.CostEstimate(
            flops=flops,
            transcendentals=transcendentals,
            bytes_accessed=bytes_accessed),
    )(x2d, wih_p, whh_p, b_p, w1_p, b1_p, w2_p, b2_p)

    return out[:B, :O]


def lstm_model_reference(src, params):
    """Pure-JAX f32 reference matching PyTorch eval semantics."""
    B, T, D = src.shape
    w_ih, w_hh = params["w_ih"], params["w_hh"]
    b = params["b_ih"] + params["b_hh"]
    H = w_hh.shape[1]
    h = jnp.zeros((B, H), jnp.float32)
    c = jnp.zeros((B, H), jnp.float32)
    for t in range(T):
        g = src[:, t, :] @ w_ih.T + h @ w_hh.T + b
        i = jax.nn.sigmoid(g[:, 0 * H:1 * H])
        f = jax.nn.sigmoid(g[:, 1 * H:2 * H])
        gg = jnp.tanh(g[:, 2 * H:3 * H])
        o = jax.nn.sigmoid(g[:, 3 * H:4 * H])
        c = f * c + i * gg
        h = o * jnp.tanh(c)
    x = jnp.maximum(h, 0.0)
    x = jnp.maximum(x @ params["fc1_w"].T + params["fc1_b"], 0.0)
    return x @ params["fc2_w"].T + params["fc2_b"]


def init_params(key, input_dim, hid_dim_lstm, hid_dim_fc, output_dim):
    """Deterministic init matching the PyTorch parameter shapes."""
    ks = jax.random.split(key, 8)
    s_lstm = 1.0 / jnp.sqrt(hid_dim_lstm)
    s_fc1 = 1.0 / jnp.sqrt(hid_dim_lstm)
    s_fc2 = 1.0 / jnp.sqrt(hid_dim_fc)
    u = lambda k, shape, s: jax.random.uniform(k, shape, jnp.float32, -s, s)
    return {
        "w_ih": u(ks[0], (4 * hid_dim_lstm, input_dim), s_lstm),
        "w_hh": u(ks[1], (4 * hid_dim_lstm, hid_dim_lstm), s_lstm),
        "b_ih": u(ks[2], (4 * hid_dim_lstm,), s_lstm),
        "b_hh": u(ks[3], (4 * hid_dim_lstm,), s_lstm),
        "fc1_w": u(ks[4], (hid_dim_fc, hid_dim_lstm), s_fc1),
        "fc1_b": u(ks[5], (hid_dim_fc,), s_fc1),
        "fc2_w": u(ks[6], (output_dim, hid_dim_fc), s_fc2),
        "fc2_b": u(ks[7], (output_dim,), s_fc2),
    }


if __name__ == "__main__":
    B, T = 8, 8
    input_dim, hid_dim_lstm, hid_dim_fc, output_dim = 16, 32, 32, 4

    key = jax.random.PRNGKey(0)
    k_x, k_p = jax.random.split(key)
    src = jax.random.normal(k_x, (B, T, input_dim), dtype=jnp.float32)
    params = init_params(k_p, input_dim, hid_dim_lstm, hid_dim_fc, output_dim)

    # t_chunk=4 -> grid of 2 time chunks, exercising the carried h/c state.
    out = lstm_model_forward(src, params, t_chunk=4)
    out = jax.block_until_ready(out)
    assert out.shape == (B, output_dim)

    ref = lstm_model_reference(src, params)
    assert float(jnp.max(jnp.abs(out - ref))) < 5e-2, "mismatch vs. reference"

    print("KERNEL_OK")
</pallas_src>

<mosaic_0001>
module attributes {stable_mosaic.version = 11 : i64} {
  func.func @lstm_model_kernel(%arg0: i32, %arg1: memref<32x16xbf16, #tpu.memory_space<vmem>>, %arg2: memref<16x512xbf16, #tpu.memory_space<vmem>>, %arg3: memref<128x512xbf16, #tpu.memory_space<vmem>>, %arg4: memref<1x512xf32, #tpu.memory_space<vmem>>, %arg5: memref<128x128xbf16, #tpu.memory_space<vmem>>, %arg6: memref<1x128xf32, #tpu.memory_space<vmem>>, %arg7: memref<128x128xbf16, #tpu.memory_space<vmem>>, %arg8: memref<1x128xf32, #tpu.memory_space<vmem>>, %arg9: memref<8x128xf32, #tpu.memory_space<vmem>>, %arg10: memref<32x512xf32, #tpu.memory_space<vmem>>, %arg11: memref<8x128xf32, #tpu.memory_space<vmem>>, %arg12: memref<8x128xf32, #tpu.memory_space<vmem>>) attributes {dimension_semantics = [#tpu.dimension_semantics<arbitrary>], iteration_bounds = array<i64: 2>, scalar_prefetch = 0 : i64, scratch_operands = 3 : i64, tpu.core_type = #tpu.core_type<tc>, window_params = [{transform_indices = @transform_0, window_bounds = array<i64: 32, 16>}, {pipeline_mode = #tpu.pipeline_mode<synchronous>, transform_indices = @transform_1, window_bounds = array<i64: 16, 512>}, {pipeline_mode = #tpu.pipeline_mode<synchronous>, transform_indices = @transform_2, window_bounds = array<i64: 128, 512>}, {pipeline_mode = #tpu.pipeline_mode<synchronous>, transform_indices = @transform_3, window_bounds = array<i64: 1, 512>}, {pipeline_mode = #tpu.pipeline_mode<synchronous>, transform_indices = @transform_4, window_bounds = array<i64: 128, 128>}, {pipeline_mode = #tpu.pipeline_mode<synchronous>, transform_indices = @transform_5, window_bounds = array<i64: 1, 128>}, {pipeline_mode = #tpu.pipeline_mode<synchronous>, transform_indices = @transform_6, window_bounds = array<i64: 128, 128>}, {pipeline_mode = #tpu.pipeline_mode<synchronous>, transform_indices = @transform_7, window_bounds = array<i64: 1, 128>}, {pipeline_mode = #tpu.pipeline_mode<synchronous>, transform_indices = @transform_8, window_bounds = array<i64: 8, 128>}]} {
    %c0_i32 = arith.constant 0 : i32
    %0 = arith.cmpi eq, %arg0, %c0_i32 : i32
    %1 = arith.extui %0 : i1 to i32
    %c0_i32_0 = arith.constant 0 : i32
    %2 = arith.cmpi ne, %1, %c0_i32_0 : i32
    scf.if %2 {
      %cst_40 = arith.constant 0.000000e+00 : f32
      %134 = vector.broadcast %cst_40 : f32 to vector<8x128xf32>
      %c0_41 = arith.constant 0 : index
      %c0_42 = arith.constant 0 : index
      %135 = vector.load %arg11[%c0_41, %c0_42] : memref<8x128xf32, #tpu.memory_space<vmem>>, vector<8x128xf32>
      tpu.vector_store %arg11[%c0_41, %c0_42], %134 {strides = array<i32>} : memref<8x128xf32, #tpu.memory_space<vmem>>, vector<8x128xf32>,
      %cst_43 = arith.constant 0.000000e+00 : f32
      %136 = vector.broadcast %cst_43 : f32 to vector<8x128xf32>
      %c0_44 = arith.constant 0 : index
      %c0_45 = arith.constant 0 : index
      %137 = vector.load %arg12[%c0_44, %c0_45] : memref<8x128xf32, #tpu.memory_space<vmem>>, vector<8x128xf32>
      tpu.vector_store %arg12[%c0_44, %c0_45], %136 {strides = array<i32>} : memref<8x128xf32, #tpu.memory_space<vmem>>, vector<8x128xf32>,
    } else {
    }
    %c0 = arith.constant 0 : index
    %c0_1 = arith.constant 0 : index
    %3 = vector.load %arg1[%c0, %c0_1] : memref<32x16xbf16, #tpu.memory_space<vmem>>, vector<32x16xbf16>
    %c0_2 = arith.constant 0 : index
    %c0_3 = arith.constant 0 : index
    %4 = vector.load %arg2[%c0_2, %c0_3] : memref<16x512xbf16, #tpu.memory_space<vmem>>, vector<16x512xbf16>
    %cst = arith.constant dense<0.000000e+00> : vector<32x512xf32>
    %5 = tpu.matmul %3, %4, %cst {dimension_numbers = #tpu.dot_dimension_numbers<[1], [0], [0], [1], [0, 0, 1, 1], [], []>} : vector<32x16xbf16>, vector<16x512xbf16>, vector<32x512xf32> -> vector<32x512xf32>
    %c0_4 = arith.constant 0 : index
    %c0_5 = arith.constant 0 : index
    %6 = vector.load %arg4[%c0_4, %c0_5] : memref<1x512xf32, #tpu.memory_space<vmem>>, vector<1x512xf32>
    %7 = vector.broadcast %6 : vector<1x512xf32> to vector<32x512xf32>
    %8 = arith.addf %5, %7 : vector<32x512xf32>
    %c0_6 = arith.constant 0 : index
    %c0_7 = arith.constant 0 : index
    %9 = vector.load %arg10[%c0_6, %c0_7] : memref<32x512xf32, #tpu.memory_space<vmem>>, vector<32x512xf32>
    tpu.vector_store %arg10[%c0_6, %c0_7], %8 {strides = array<i32>} : memref<32x512xf32, #tpu.memory_space<vmem>>, vector<32x512xf32>,
    %c0_8 = arith.constant 0 : index
    %c0_9 = arith.constant 0 : index
    %10 = vector.load %arg3[%c0_8, %c0_9] : memref<128x512xbf16, #tpu.memory_space<vmem>>, vector<128x512xbf16>
    %c0_10 = arith.constant 0 : index
    %c0_11 = arith.constant 0 : index
    %11 = vector.load %arg11[%c0_10, %c0_11] : memref<8x128xf32, #tpu.memory_space<vmem>>, vector<8x128xf32>
    %c0_12 = arith.constant 0 : index
    %c0_13 = arith.constant 0 : index
    %12 = vector.load %arg12[%c0_12, %c0_13] : memref<8x128xf32, #tpu.memory_space<vmem>>, vector<8x128xf32>
    %c0_14 = arith.constant 0 : index
    %c0_15 = arith.constant 0 : index
    %13 = vector.load %arg10[%c0_14, %c0_15] : memref<32x512xf32, #tpu.memory_space<vmem>>, vector<8x512xf32>
    %14 = arith.truncf %11 : vector<8x128xf32> to vector<8x128xbf16>
    %cst_16 = arith.constant dense<0.000000e+00> : vector<8x512xf32>
    %15 = tpu.matmul %14, %10, %cst_16 {dimension_numbers = #tpu.dot_dimension_numbers<[1], [0], [0], [1], [0, 0, 1, 1], [], []>} : vector<8x128xbf16>, vector<128x512xbf16>, vector<8x512xf32> -> vector<8x512xf32>
    %16 = arith.addf %13, %15 : vector<8x512xf32>
    %17 = vector.extract_strided_slice %16 {offsets = [0, 0], sizes = [8, 128], strides = [1, 1]} : vector<8x512xf32> to vector<8x128xf32>
    %18 = arith.negf %17 : vector<8x128xf32>
    %19 = math.exp %18 : vector<8x128xf32>
    %cst_17 = arith.constant 1.000000e+00 : f32
    %20 = vector.broadcast %cst_17 : f32 to vector<8x128xf32>
    %21 = arith.addf %20, %19 : vector<8x128xf32>
    %22 = arith.divf %20, %21 : vector<8x128xf32>
    %23 = vector.extract_strided_slice %16 {offsets = [0, 128], sizes = [8, 128], strides = [1, 1]} : vector<8x512xf32> to vector<8x128xf32>
    %24 = arith.negf %23 : vector<8x128xf32>
    %25 = math.exp %24 : vector<8x128xf32>
    %cst_18 = arith.constant 1.000000e+00 : f32
    %26 = vector.broadcast %cst_18 : f32 to vector<8x128xf32>
    %27 = arith.addf %26, %25 : vector<8x128xf32>
    %28 = arith.divf %26, %27 : vector<8x128xf32>
    %29 = vector.extract_strided_slice %16 {offsets = [0, 256], sizes = [8, 128], strides = [1, 1]} : vector<8x512xf32> to vector<8x128xf32>
    %30 = math.tanh %29 : vector<8x128xf32>
    %31 = vector.extract_strided_slice %16 {offsets = [0, 384], sizes = [8, 128], strides = [1, 1]} : vector<8x512xf32> to vector<8x128xf32>
    %32 = arith.negf %31 : vector<8x128xf32>
    %33 = math.exp %32 : vector<8x128xf32>
    %cst_19 = arith.constant 1.000000e+00 : f32
    %34 = vector.broadcast %cst_19 : f32 to vector<8x128xf32>
    %35 = arith.addf %34, %33 : vector<8x128xf32>
    %36 = arith.divf %34, %35 : vector<8x128xf32>
    %37 = arith.mulf %28, %12 : vector<8x128xf32>
    %38 = arith.mulf %22, %30 : vector<8x128xf32>
    %39 = arith.addf %37, %38 : vector<8x128xf32>
    %40 = math.tanh %39 : vector<8x128xf32>
    %41 = arith.mulf %36, %40 : vector<8x128xf32>
    %c8 = arith.constant 8 : index
    %c0_20 = arith.constant 0 : index
    %42 = vector.load %arg10[%c8, %c0_20] : memref<32x512xf32, #tpu.memory_space<vmem>>, vector<8x512xf32>
    %43 = arith.truncf %41 : vector<8x128xf32> to vector<8x128xbf16>
    %cst_21 = arith.constant dense<0.000000e+00> : vector<8x512xf32>
    %44 = tpu.matmul %43, %10, %cst_21 {dimension_numbers = #tpu.dot_dimension_numbers<[1], [0], [0], [1], [0, 0, 1, 1], [], []>} : vector<8x128xbf16>, vector<128x512xbf16>, vector<8x512xf32> -> vector<8x512xf32>
    %45 = arith.addf %42, %44 : vector<8x512xf32>
    %46 = vector.extract_strided_slice %45 {offsets = [0, 0], sizes = [8, 128], strides = [1, 1]} : vector<8x512xf32> to vector<8x128xf32>
    %47 = arith.negf %46 : vector<8x128xf32>
    %48 = math.exp %47 : vector<8x128xf32>
    %cst_22 = arith.constant 1.000000e+00 : f32
    %49 = vector.broadcast %cst_22 : f32 to vector<8x128xf32>
    %50 = arith.addf %49, %48 : vector<8x128xf32>
    %51 = arith.divf %49, %50 : vector<8x128xf32>
    %52 = vector.extract_strided_slice %45 {offsets = [0, 128], sizes = [8, 128], strides = [1, 1]} : vector<8x512xf32> to vector<8x128xf32>
    %53 = arith.negf %52 : vector<8x128xf32>
    %54 = math.exp %53 : vector<8x128xf32>
    %cst_23 = arith.constant 1.000000e+00 : f32
    %55 = vector.broadcast %cst_23 : f32 to vector<8x128xf32>
    %56 = arith.addf %55, %54 : vector<8x128xf32>
    %57 = arith.divf %55, %56 : vector<8x128xf32>
    %58 = vector.extract_strided_slice %45 {offsets = [0, 256], sizes = [8, 128], strides = [1, 1]} : vector<8x512xf32> to vector<8x128xf32>
    %59 = math.tanh %58 : vector<8x128xf32>
    %60 = vector.extract_strided_slice %45 {offsets = [0, 384], sizes = [8, 128], strides = [1, 1]} : vector<8x512xf32> to vector<8x128xf32>
    %61 = arith.negf %60 : vector<8x128xf32>
    %62 = math.exp %61 : vector<8x128xf32>
    %cst_24 = arith.constant 1.000000e+00 : f32
    %63 = vector.broadcast %cst_24 : f32 to vector<8x128xf32>
    %64 = arith.addf %63, %62 : vector<8x128xf32>
    %65 = arith.divf %63, %64 : vector<8x128xf32>
    %66 = arith.mulf %57, %39 : vector<8x128xf32>
    %67 = arith.mulf %51, %59 : vector<8x128xf32>
    %68 = arith.addf %66, %67 : vector<8x128xf32>
    %69 = math.tanh %68 : vector<8x128xf32>
    %70 = arith.mulf %65, %69 : vector<8x128xf32>
    %c16 = arith.constant 16 : index
    %c0_25 = arith.constant 0 : index
    %71 = vector.load %arg10[%c16, %c0_25] : memref<32x512xf32, #tpu.memory_space<vmem>>, vector<8x512xf32>
    %72 = arith.truncf %70 : vector<8x128xf32> to vector<8x128xbf16>
    %cst_26 = arith.constant dense<0.000000e+00> : vector<8x512xf32>
    %73 = tpu.matmul %72, %10, %cst_26 {dimension_numbers = #tpu.dot_dimension_numbers<[1], [0], [0], [1], [0, 0, 1, 1], [], []>} : vector<8x128xbf16>, vector<128x512xbf16>, vector<8x512xf32> -> vector<8x512xf32>
    %74 = arith.addf %71, %73 : vector<8x512xf32>
    %75 = vector.extract_strided_slice %74 {offsets = [0, 0], sizes = [8, 128], strides = [1, 1]} : vector<8x512xf32> to vector<8x128xf32>
    %76 = arith.negf %75 : vector<8x128xf32>
    %77 = math.exp %76 : vector<8x128xf32>
    %cst_27 = arith.constant 1.000000e+00 : f32
    %78 = vector.broadcast %cst_27 : f32 to vector<8x128xf32>
    %79 = arith.addf %78, %77 : vector<8x128xf32>
    %80 = arith.divf %78, %79 : vector<8x128xf32>
    %81 = vector.extract_strided_slice %74 {offsets = [0, 128], sizes = [8, 128], strides = [1, 1]} : vector<8x512xf32> to vector<8x128xf32>
    %82 = arith.negf %81 : vector<8x128xf32>
    %83 = math.exp %82 : vector<8x128xf32>
    %cst_28 = arith.constant 1.000000e+00 : f32
    %84 = vector.broadcast %cst_28 : f32 to vector<8x128xf32>
    %85 = arith.addf %84, %83 : vector<8x128xf32>
    %86 = arith.divf %84, %85 : vector<8x128xf32>
    %87 = vector.extract_strided_slice %74 {offsets = [0, 256], sizes = [8, 128], strides = [1, 1]} : vector<8x512xf32> to vector<8x128xf32>
    %88 = math.tanh %87 : vector<8x128xf32>
    %89 = vector.extract_strided_slice %74 {offsets = [0, 384], sizes = [8, 128], strides = [1, 1]} : vector<8x512xf32> to vector<8x128xf32>
    %90 = arith.negf %89 : vector<8x128xf32>
    %91 = math.exp %90 : vector<8x128xf32>
    %cst_29 = arith.constant 1.000000e+00 : f32
    %92 = vector.broadcast %cst_29 : f32 to vector<8x128xf32>
    %93 = arith.addf %92, %91 : vector<8x128xf32>
    %94 = arith.divf %92, %93 : vector<8x128xf32>
    %95 = arith.mulf %86, %68 : vector<8x128xf32>
    %96 = arith.mulf %80, %88 : vector<8x128xf32>
    %97 = arith.addf %95, %96 : vector<8x128xf32>
    %98 = math.tanh %97 : vector<8x128xf32>
    %99 = arith.mulf %94, %98 : vector<8x128xf32>
    %c24 = arith.constant 24 : index
    %c0_30 = arith.constant 0 : index
    %100 = vector.load %arg10[%c24, %c0_30] : memref<32x512xf32, #tpu.memory_space<vmem>>, vector<8x512xf32>
    %101 = arith.truncf %99 : vector<8x128xf32> to vector<8x128xbf16>
    %cst_31 = arith.constant dense<0.000000e+00> : vector<8x512xf32>
    %102 = tpu.matmul %101, %10, %cst_31 {dimension_numbers = #tpu.dot_dimension_numbers<[1], [0], [0], [1], [0, 0, 1, 1], [], []>} : vector<8x128xbf16>, vector<128x512xbf16>, vector<8x512xf32> -> vector<8x512xf32>
    %103 = arith.addf %100, %102 : vector<8x512xf32>
    %104 = vector.extract_strided_slice %103 {offsets = [0, 0], sizes = [8, 128], strides = [1, 1]} : vector<8x512xf32> to vector<8x128xf32>
    %105 = arith.negf %104 : vector<8x128xf32>
    %106 = math.exp %105 : vector<8x128xf32>
    %cst_32 = arith.constant 1.000000e+00 : f32
    %107 = vector.broadcast %cst_32 : f32 to vector<8x128xf32>
    %108 = arith.addf %107, %106 : vector<8x128xf32>
    %109 = arith.divf %107, %108 : vector<8x128xf32>
    %110 = vector.extract_strided_slice %103 {offsets = [0, 128], sizes = [8, 128], strides = [1, 1]} : vector<8x512xf32> to vector<8x128xf32>
    %111 = arith.negf %110 : vector<8x128xf32>
    %112 = math.exp %111 : vector<8x128xf32>
    %cst_33 = arith.constant 1.000000e+00 : f32
    %113 = vector.broadcast %cst_33 : f32 to vector<8x128xf32>
    %114 = arith.addf %113, %112 : vector<8x128xf32>
    %115 = arith.divf %113, %114 : vector<8x128xf32>
    %116 = vector.extract_strided_slice %103 {offsets = [0, 256], sizes = [8, 128], strides = [1, 1]} : vector<8x512xf32> to vector<8x128xf32>
    %117 = math.tanh %116 : vector<8x128xf32>
    %118 = vector.extract_strided_slice %103 {offsets = [0, 384], sizes = [8, 128], strides = [1, 1]} : vector<8x512xf32> to vector<8x128xf32>
    %119 = arith.negf %118 : vector<8x128xf32>
    %120 = math.exp %119 : vector<8x128xf32>
    %cst_34 = arith.constant 1.000000e+00 : f32
    %121 = vector.broadcast %cst_34 : f32 to vector<8x128xf32>
    %122 = arith.addf %121, %120 : vector<8x128xf32>
    %123 = arith.divf %121, %122 : vector<8x128xf32>
    %124 = arith.mulf %115, %97 : vector<8x128xf32>
    %125 = arith.mulf %109, %117 : vector<8x128xf32>
    %126 = arith.addf %124, %125 : vector<8x128xf32>
    %127 = math.tanh %126 : vector<8x128xf32>
    %128 = arith.mulf %123, %127 : vector<8x128xf32>
    %c0_35 = arith.constant 0 : index
    %c0_36 = arith.constant 0 : index
    %129 = vector.load %arg11[%c0_35, %c0_36] : memref<8x128xf32, #tpu.memory_space<vmem>>, vector<8x128xf32>
    tpu.vector_store %arg11[%c0_35, %c0_36], %128 {strides = array<i32>} : memref<8x128xf32, #tpu.memory_space<vmem>>, vector<8x128xf32>,
    %c0_37 = arith.constant 0 : index
    %c0_38 = arith.constant 0 : index
    %130 = vector.load %arg12[%c0_37, %c0_38] : memref<8x128xf32, #tpu.memory_space<vmem>>, vector<8x128xf32>
    tpu.vector_store %arg12[%c0_37, %c0_38], %126 {strides = array<i32>} : memref<8x128xf32, #tpu.memory_space<vmem>>, vector<8x128xf32>,
    %c1_i32 = arith.constant 1 : i32
    %131 = arith.cmpi eq, %arg0, %c1_i32 : i32
    %132 = arith.extui %131 : i1 to i32
    %c0_i32_39 = arith.constant 0 : i32
    %133 = arith.cmpi ne, %132, %c0_i32_39 : i32
    scf.if %133 {
      %cst_40 = arith.constant 0.000000e+00 : f32
      %134 = vector.broadcast %cst_40 : f32 to vector<8x128xf32>
      %135 = arith.maximumf %128, %134 : vector<8x128xf32>
      %136 = arith.truncf %135 : vector<8x128xf32> to vector<8x128xbf16>
      %c0_41 = arith.constant 0 : index
      %c0_42 = arith.constant 0 : index
      %137 = vector.load %arg5[%c0_41, %c0_42] : memref<128x128xbf16, #tpu.memory_space<vmem>>, vector<128x128xbf16>
      %cst_43 = arith.constant dense<0.000000e+00> : vector<8x128xf32>
      %138 = tpu.matmul %136, %137, %cst_43 {dimension_numbers = #tpu.dot_dimension_numbers<[1], [0], [0], [1], [0, 0, 1, 1], [], []>} : vector<8x128xbf16>, vector<128x128xbf16>, vector<8x128xf32> -> vector<8x128xf32>
      %c0_44 = arith.constant 0 : index
      %c0_45 = arith.constant 0 : index
      %139 = vector.load %arg6[%c0_44, %c0_45] : memref<1x128xf32, #tpu.memory_space<vmem>>, vector<1x128xf32>
      %140 = vector.broadcast %139 : vector<1x128xf32> to vector<8x128xf32>
      %141 = arith.addf %138, %140 : vector<8x128xf32>
      %cst_46 = arith.constant 0.000000e+00 : f32
      %142 = vector.broadcast %cst_46 : f32 to vector<8x128xf32>
      %143 = arith.maximumf %141, %142 : vector<8x128xf32>
      %144 = arith.truncf %143 : vector<8x128xf32> to vector<8x128xbf16>
      %c0_47 = arith.constant 0 : index
      %c0_48 = arith.constant 0 : index
      %145 = vector.load %arg7[%c0_47, %c0_48] : memref<128x128xbf16, #tpu.memory_space<vmem>>, vector<128x128xbf16>
      %cst_49 = arith.constant dense<0.000000e+00> : vector<8x128xf32>
      %146 = tpu.matmul %144, %145, %cst_49 {dimension_numbers = #tpu.dot_dimension_numbers<[1], [0], [0], [1], [0, 0, 1, 1], [], []>} : vector<8x128xbf16>, vector<128x128xbf16>, vector<8x128xf32> -> vector<8x128xf32>
      %c0_50 = arith.constant 0 : index
      %c0_51 = arith.constant 0 : index
      %147 = vector.load %arg8[%c0_50, %c0_51] : memref<1x128xf32, #tpu.memory_space<vmem>>, vector<1x128xf32>
      %148 = vector.broadcast %147 : vector<1x128xf32> to vector<8x128xf32>
      %149 = arith.addf %146, %148 : vector<8x128xf32>
      %c0_52 = arith.constant 0 : index
      %c0_53 = arith.constant 0 : index
      %150 = vector.load %arg9[%c0_52, %c0_53] : memref<8x128xf32, #tpu.memory_space<vmem>>, vector<8x128xf32>
      tpu.vector_store %arg9[%c0_52, %c0_53], %149 {strides = array<i32>} : memref<8x128xf32, #tpu.memory_space<vmem>>, vector<8x128xf32>,
    } else {
    }
    return
  }
  func.func @transform_0(%arg0: i32) -> (i32, i32) {
    %c0_i32 = arith.constant 0 : i32
    %c0_i32_0 = arith.constant 0 : i32
    return %arg0, %c0_i32 : i32, i32
  }
  func.func @transform_1(%arg0: i32) -> (i32, i32) {
    %c0_i32 = arith.constant 0 : i32
    %c0_i32_0 = arith.constant 0 : i32
    %c0_i32_1 = arith.constant 0 : i32
    return %c0_i32, %c0_i32_0 : i32, i32
  }
  func.func @transform_2(%arg0: i32) -> (i32, i32) {
    %c0_i32 = arith.constant 0 : i32
    %c0_i32_0 = arith.constant 0 : i32
    %c0_i32_1 = arith.constant 0 : i32
    return %c0_i32, %c0_i32_0 : i32, i32
  }
  func.func @transform_3(%arg0: i32) -> (i32, i32) {
    %c0_i32 = arith.constant 0 : i32
    %c0_i32_0 = arith.constant 0 : i32
    %c0_i32_1 = arith.constant 0 : i32
    return %c0_i32, %c0_i32_0 : i32, i32
  }
  func.func @transform_4(%arg0: i32) -> (i32, i32) {
    %c0_i32 = arith.constant 0 : i32
    %c0_i32_0 = arith.constant 0 : i32
    %c0_i32_1 = arith.constant 0 : i32
    return %c0_i32, %c0_i32_0 : i32, i32
  }
  func.func @transform_5(%arg0: i32) -> (i32, i32) {
    %c0_i32 = arith.constant 0 : i32
    %c0_i32_0 = arith.constant 0 : i32
    %c0_i32_1 = arith.constant 0 : i32
    return %c0_i32, %c0_i32_0 : i32, i32
  }
  func.func @transform_6(%arg0: i32) -> (i32, i32) {
    %c0_i32 = arith.constant 0 : i32
    %c0_i32_0 = arith.constant 0 : i32
    %c0_i32_1 = arith.constant 0 : i32
    return %c0_i32, %c0_i32_0 : i32, i32
  }
  func.func @transform_7(%arg0: i32) -> (i32, i32) {
    %c0_i32 = arith.constant 0 : i32
    %c0_i32_0 = arith.constant 0 : i32
    %c0_i32_1 = arith.constant 0 : i32
    return %c0_i32, %c0_i32_0 : i32, i32
  }
  func.func @transform_8(%arg0: i32) -> (i32, i32) {
    %c0_i32 = arith.constant 0 : i32
    %c0_i32_0 = arith.constant 0 : i32
    %c0_i32_1 = arith.constant 0 : i32
    return %c0_i32, %c0_i32_0 : i32, i32
  }
}

</mosaic_0001>

<llo_original>
// kernel: tpu_custom_call.1
$region0: #{tpu_custom_call.1}
  #allocation0 [shape = 'u32[]', space=smem, size = 0x4, offset = 0x4, fixed_abs, tag = 'smem constant byte address 0x4 - core index']
  #allocation1 [shape = 'u32[144,128]{1,0:T(1,128)}', space=vmem, size = 0x12000, scoped, tag = 'internal scratch']
  #allocation2 [shape = 'f32[32,512]{1,0:T(8,128)}', space=vmem, size = 0x10000, scoped, tag = 'scratch operand']
  #allocation3 [shape = 'f32[8,128]{1,0:T(8,128)}', space=vmem, size = 0x1000, scoped, tag = 'scratch operand']
  #allocation4 [shape = 'f32[8,128]{1,0:T(8,128)}', space=vmem, size = 0x1000, scoped, tag = 'scratch operand']
  %s0 = inlined_call_operand.vmem [shape: bf16[64,16], index: 0, kind: input, shape index: {}]
  %s1 = inlined_call_operand.vmem [shape: bf16[16,512], index: 1, kind: input, shape index: {}]
  %s2 = inlined_call_operand.hbm [shape: bf16[128,512], index: 2, kind: input, shape index: {}]
  %s3 = inlined_call_operand.vmem [shape: f32[1,512], index: 3, kind: input, shape index: {}]
  %s4 = inlined_call_operand.hbm [shape: bf16[128,128], index: 4, kind: input, shape index: {}]
  %s5 = inlined_call_operand.vmem [shape: f32[1,128], index: 5, kind: input, shape index: {}]
  %s6 = inlined_call_operand.hbm [shape: bf16[128,128], index: 6, kind: input, shape index: {}]
  %s7 = inlined_call_operand.vmem [shape: f32[1,128], index: 7, kind: input, shape index: {}]
  %s8 = inlined_call_operand.hbm [shape: f32[8,128], index: 8, kind: output, shape index: {}]
  %s9 = sld [smem:[#allocation0]]
  $region85: #{tpu_custom_call.1} parent=0
    _
  %s11 = ssub.s32 1, %s9
  %s12 = scalar_select 0, %s11, %s9
  $region1: #{tpu_custom_call.1} parent=0
    #allocation5 [shape = 'u8[131072]{0}', space=vmem, size = 0x20000, scoped, tag = 'input window, operand 2, single buffered']
    #allocation6 [shape = 's32[2]{0}', space=sflag, size = 0x8, scoped, tag = 'scoped memory for tpu_custom_call.1']
    #allocation7 [shape = 's32[2]{0}', space=sflag, size = 0x8, scoped, tag = 'scoped memory for tpu_custom_call.1']
    #allocation8 [shape = 'u8[32768]{0}', space=vmem, size = 0x8000, scoped, tag = 'input window, operand 4, single buffered']
    #allocation9 [shape = 's32[1]{0}', space=sflag, size = 0x4, scoped, tag = 'scoped memory for tpu_custom_call.1']
    #allocation10 [shape = 'u8[32768]{0}', space=vmem, size = 0x8000, scoped, tag = 'input window, operand 6, single buffered']
    #allocation11 [shape = 'u8[4096]{0}', space=vmem, size = 0x1000, scoped, tag = 'output window, operand 0, single buffered']
    %13 = vsyncpa [#allocation6], 0
    %14 = vsyncpa [#allocation9], 0
    %15 = vsyncpa [#allocation7], 0
    loop: start=0, step=1, limit=4
    $region2: #{tpu_custom_call.1} parent=1 // loop_pre_header
      _
    $region3: #{tpu_custom_call.1} parent=1 // loop_header
      %s17 = sphi 0, %s21
      %p18 = scmp.ge.s32.totalorder %s17, 4
      %s27 = sphi 0, %s29
      %s30 = sphi 0, %s27
      %s31 = sphi 0, %s30
      %s47 = sphi 0, %s31
      %s51 = sphi 0, %s51
      %s53 = sphi 0, %s51
      %s54 = sphi 0, %s53
      %s68 = sphi 0, %s54
      %s72 = sphi 0, %s72
      %s74 = sphi 0, %s72
      %s75 = sphi 0, %s74
      %s89 = sphi 0, %s75
      %s93 = sphi 0, %s93
      %s95 = sphi 0, %s93
      %s96 = sphi 0, %s95
      %s110 = sphi 0, %s96
      %s114 = sphi 0, %s114
      %s116 = sphi 0, %s114
      %s117 = sphi 0, %s116
      %s131 = sphi 0, %s117
      %s135 = sphi 0, %s135
      %s137 = sphi 0, %s135
      %s138 = sphi 0, %s137
      %s152 = sphi 0, %s138
      %s156 = sphi 0, %s156
      %s158 = sphi 0, %s156
      %s159 = sphi 0, %s158
      %s173 = sphi 0, %s159
      %s177 = sphi 0, %s177
      %s179 = sphi 0, %s177
      %s180 = sphi 0, %s179
      %s194 = sphi 0, %s180
      %s198 = sphi 0, %s198
      %s200 = sphi 0, %s198
      %s201 = sphi 0, %s200
      %s215 = sphi 0, %s201
    $region4: #{tpu_custom_call.1} parent=1 // loop_header_branch
      %20 = sbr.rel (%p18) target = $region8
    $region5: #{tpu_custom_call.1} parent=1 // loop_body
      %s22 = ssub.s32 %s17, 1
      %s23 = ssub.s32 %s17, 2
      %s24 = sadd.s32 %s17, 1
      %s25 = ssub.s32 %s17, %s24
      %p26 = scmp.eq.s32.totalorder %s25, 0
      %s28 = sadd.s32 %s27, 1
      %s29 = scalar_select %p26, %s27, %s28
      %p32 = pneg %p26
      %p33 = scmp.eq.s32.totalorder %s17, 1
      %p34 = por %p32, %p33
      %p35 = scmp.ne.s32.totalorder %s27, %s30
      %p36 = scmp.eq.s32.totalorder %s17, 0
      %p37 = por %p35, %p36
      %p38 = scmp.ne.s32.totalorder %s27, %s30
      %p39 = scmp.eq.s32.totalorder %s22, 1
      %p40 = por %p38, %p39
      %p41 = scmp.ne.s32.totalorder %s30, %s31
      %p42 = scmp.eq.s32.totalorder %s22, 0
      %p43 = por %p41, %p42
      %p44 = scmp.ne.s32.totalorder %s30, %s31
      %p45 = scmp.eq.s32.totalorder %s23, 1
      %p46 = por %p44, %p45
      %p48 = scmp.ne.s32.totalorder %s31, %s47
      %p49 = scmp.eq.s32.totalorder %s23, 0
      %p50 = por %p48, %p49
      %s52 = sadd.s32 %s51, 1
      %p55 = scmp.eq.s32.totalorder %s17, 1
      %p56 = scmp.ne.s32.totalorder %s51, %s53
      %p57 = scmp.eq.s32.totalorder %s17, 0
      %p58 = por %p56, %p57
      %p59 = scmp.ne.s32.totalorder %s51, %s53
      %p60 = scmp.eq.s32.totalorder %s22, 1
      %p61 = por %p59, %p60
      %p62 = scmp.ne.s32.totalorder %s53, %s54
      %p63 = scmp.eq.s32.totalorder %s22, 0
      %p64 = por %p62, %p63
      %p65 = scmp.ne.s32.totalorder %s53, %s54
      %p66 = scmp.eq.s32.totalorder %s23, 1
      %p67 = por %p65, %p66
      %p69 = scmp.ne.s32.totalorder %s54, %s68
      %p70 = scmp.eq.s32.totalorder %s23, 0
      %p71 = por %p69, %p70
      %s73 = sadd.s32 %s72, 1
      %p76 = scmp.eq.s32.totalorder %s17, 1
      %p77 = scmp.ne.s32.totalorder %s72, %s74
      %p78 = scmp.eq.s32.totalorder %s17, 0
      %p79 = por %p77, %p78
      %p80 = scmp.ne.s32.totalorder %s72, %s74
      %p81 = scmp.eq.s32.totalorder %s22, 1
      %p82 = por %p80, %p81
      %p83 = scmp.ne.s32.totalorder %s74, %s75
      %p84 = scmp.eq.s32.totalorder %s22, 0
      %p85 = por %p83, %p84
      %p86 = scmp.ne.s32.totalorder %s74, %s75
      %p87 = scmp.eq.s32.totalorder %s23, 1
      %p88 = por %p86, %p87
      %p90 = scmp.ne.s32.totalorder %s75, %s89
      %p91 = scmp.eq.s32.totalorder %s23, 0
      %p92 = por %p90, %p91
      %s94 = sadd.s32 %s93, 1
      %p97 = scmp.eq.s32.totalorder %s17, 1
      %p98 = scmp.ne.s32.totalorder %s93, %s95
      %p99 = scmp.eq.s32.totalorder %s17, 0
      %p100 = por %p98, %p99
      %p101 = scmp.ne.s32.totalorder %s93, %s95
      %p102 = scmp.eq.s32.totalorder %s22, 1
      %p103 = por %p101, %p102
      %p104 = scmp.ne.s32.totalorder %s95, %s96
      %p105 = scmp.eq.s32.totalorder %s22, 0
      %p106 = por %p104, %p105
      %p107 = scmp.ne.s32.totalorder %s95, %s96
      %p108 = scmp.eq.s32.totalorder %s23, 1
      %p109 = por %p107, %p108
      %p111 = scmp.ne.s32.totalorder %s96, %s110
      %p112 = scmp.eq.s32.totalorder %s23, 0
      %p113 = por %p111, %p112
      %s115 = sadd.s32 %s114, 1
      %p118 = scmp.eq.s32.totalorder %s17, 1
      %p119 = scmp.ne.s32.totalorder %s114, %s116
      %p120 = scmp.eq.s32.totalorder %s17, 0
      %p121 = por %p119, %p120
      %p122 = scmp.ne.s32.totalorder %s114, %s116
      %p123 = scmp.eq.s32.totalorder %s22, 1
      %p124 = por %p122, %p123
      %p125 = scmp.ne.s32.totalorder %s116, %s117
      %p126 = scmp.eq.s32.totalorder %s22, 0
      %p127 = por %p125, %p126
      %p128 = scmp.ne.s32.totalorder %s116, %s117
      %p129 = scmp.eq.s32.totalorder %s23, 1
      %p130 = por %p128, %p129
      %p132 = scmp.ne.s32.totalorder %s117, %s131
      %p133 = scmp.eq.s32.totalorder %s23, 0
      %p134 = por %p132, %p133
      %s136 = sadd.s32 %s135, 1
      %p139 = scmp.eq.s32.totalorder %s17, 1
      %p140 = scmp.ne.s32.totalorder %s135, %s137
      %p141 = scmp.eq.s32.totalorder %s17, 0
      %p142 = por %p140, %p141
      %p143 = scmp.ne.s32.totalorder %s135, %s137
      %p144 = scmp.eq.s32.totalorder %s22, 1
      %p145 = por %p143, %p144
      %p146 = scmp.ne.s32.totalorder %s137, %s138
      %p147 = scmp.eq.s32.totalorder %s22, 0
      %p148 = por %p146, %p147
      %p149 = scmp.ne.s32.totalorder %s137, %s138
      %p150 = scmp.eq.s32.totalorder %s23, 1
      %p151 = por %p149, %p150
      %p153 = scmp.ne.s32.totalorder %s138, %s152
      %p154 = scmp.eq.s32.totalorder %s23, 0
      %p155 = por %p153, %p154
      %s157 = sadd.s32 %s156, 1
      %p160 = scmp.eq.s32.totalorder %s17, 1
      %p161 = scmp.ne.s32.totalorder %s156, %s158
      %p162 = scmp.eq.s32.totalorder %s17, 0
      %p163 = por %p161, %p162
      %p164 = scmp.ne.s32.totalorder %s156, %s158
      %p165 = scmp.eq.s32.totalorder %s22, 1
      %p166 = por %p164, %p165
      %p167 = scmp.ne.s32.totalorder %s158, %s159
      %p168 = scmp.eq.s32.totalorder %s22, 0
      %p169 = por %p167, %p168
      %p170 = scmp.ne.s32.totalorder %s158, %s159
      %p171 = scmp.eq.s32.totalorder %s23, 1
      %p172 = por %p170, %p171
      %p174 = scmp.ne.s32.totalorder %s159, %s173
      %p175 = scmp.eq.s32.totalorder %s23, 0
      %p176 = por %p174, %p175
      %s178 = sadd.s32 %s177, 1
      %p181 = scmp.eq.s32.totalorder %s17, 1
      %p182 = scmp.ne.s32.totalorder %s177, %s179
      %p183 = scmp.eq.s32.totalorder %s17, 0
      %p184 = por %p182, %p183
      %p185 = scmp.ne.s32.totalorder %s177, %s179
      %p186 = scmp.eq.s32.totalorder %s22, 1
      %p187 = por %p185, %p186
      %p188 = scmp.ne.s32.totalorder %s179, %s180
      %p189 = scmp.eq.s32.totalorder %s22, 0
      %p190 = por %p188, %p189
      %p191 = scmp.ne.s32.totalorder %s179, %s180
      %p192 = scmp.eq.s32.totalorder %s23, 1
      %p193 = por %p191, %p192
      %p195 = scmp.ne.s32.totalorder %s180, %s194
      %p196 = scmp.eq.s32.totalorder %s23, 0
      %p197 = por %p195, %p196
      %s199 = sadd.s32 %s198, 1
      %p202 = scmp.eq.s32.totalorder %s17, 1
      %p203 = scmp.ne.s32.totalorder %s198, %s200
      %p204 = scmp.eq.s32.totalorder %s17, 0
      %p205 = por %p203, %p204
      %p206 = scmp.ne.s32.totalorder %s198, %s200
      %p207 = scmp.eq.s32.totalorder %s22, 1
      %p208 = por %p206, %p207
      %p209 = scmp.ne.s32.totalorder %s200, %s201
      %p210 = scmp.eq.s32.totalorder %s22, 0
      %p211 = por %p209, %p210
      %p212 = scmp.ne.s32.totalorder %s200, %s201
      %p213 = scmp.eq.s32.totalorder %s23, 1
      %p214 = por %p212, %p213
      %p216 = scmp.ne.s32.totalorder %s201, %s215
      %p217 = scmp.eq.s32.totalorder %s23, 0
      %p218 = por %p216, %p217
      %p219 = scmp.le.s32.totalorder 1, %s17
      %p220 = scmp.lt.s32.totalorder %s17, 3
      %p221 = pnand %p219, %p220
      %p222 = pneg %p221
      // Predicated region
      $region9: #{tpu_custom_call.1} parent=5 // pred_check
        _
      $region10: #{tpu_custom_call.1} parent=5 // pred_check_branch
        %224 = sbr.rel (%p221) target = $region12
      $region11: #{tpu_custom_call.1} parent=5 // pred_region
        %s225 = ssub.s32 %s17, 1
        // Predicated region
        $region13: #{tpu_custom_call.1} parent=11 // pred_check
          %p226 = pneg %p64
        $region14: #{tpu_custom_call.1} parent=11 // pred_check_branch
          %228 = sbr.rel (%p226) target = $region16
        $region15: #{tpu_custom_call.1} parent=11 // pred_region
          _
        $region16: #{tpu_custom_call.1} parent=11 // pred_fallthru
          _
        // Predicated region
        $region17: #{tpu_custom_call.1} parent=11 // pred_check
          %p229 = pneg %p85
        $region18: #{tpu_custom_call.1} parent=11 // pred_check_branch
          %231 = sbr.rel (%p229) target = $region20
        $region19: #{tpu_custom_call.1} parent=11 // pred_region
          %s233 = ssub.s32 4096, 4096
          %234 = vsyncadd [#allocation6], %s233
          %s235 = sshll.u32 [#allocation5], 4
          %s236 = int_to_ptr.vmem [resolvable:$true] %s235
          %241 = dma.hbm_to_vmem [thread:$0]  %s2, 4096, %s236, [#allocation6], 256, 256, 16
        $region20: #{tpu_custom_call.1} parent=11 // pred_fallthru
          _
        // Predicated region
        $region21: #{tpu_custom_call.1} parent=11 // pred_check
          %p242 = pneg %p106
        $region22: #{tpu_custom_call.1} parent=11 // pred_check_branch
          %244 = sbr.rel (%p242) target = $region24
        $region23: #{tpu_custom_call.1} parent=11 // pred_region
          _
        $region24: #{tpu_custom_call.1} parent=11 // pred_fallthru
          _
        // Predicated region
        $region25: #{tpu_custom_call.1} parent=11 // pred_check
          %p245 = pneg %p127
        $region26: #{tpu_custom_call.1} parent=11 // pred_check_branch
          %247 = sbr.rel (%p245) target = $region28
        $region27: #{tpu_custom_call.1} parent=11 // pred_region
          %s249 = ssub.s32 1024, 1024
          %250 = vsyncadd [#allocation9], %s249
          %s251 = sshll.u32 [#allocation8], 4
          %s252 = int_to_ptr.vmem [resolvable:$true] %s251
          %257 = dma.hbm_to_vmem [thread:$0]  %s4, 1024, %s252, [#allocation9], 64, 64, 4
        $region28: #{tpu_custom_call.1} parent=11 // pred_fallthru
          _
        // Predicated region
        $region29: #{tpu_custom_call.1} parent=11 // pred_check
          %p258 = pneg %p148
        $region30: #{tpu_custom_call.1} parent=11 // pred_check_branch
          %260 = sbr.rel (%p258) target = $region32
        $region31: #{tpu_custom_call.1} parent=11 // pred_region
          _
        $region32: #{tpu_custom_call.1} parent=11 // pred_fallthru
          _
        // Predicated region
        $region33: #{tpu_custom_call.1} parent=11 // pred_check
          %p261 = pneg %p169
        $region34: #{tpu_custom_call.1} parent=11 // pred_check_branch
          %263 = sbr.rel (%p261) target = $region36
        $region35: #{tpu_custom_call.1} parent=11 // pred_region
          %s265 = ssub.s32 1024, 1024
          %266 = vsyncadd [#allocation9], %s265
          %s267 = sshll.u32 [#allocation10], 4
          %s268 = int_to_ptr.vmem [resolvable:$true] %s267
          %273 = dma.hbm_to_vmem [thread:$0]  %s6, 1024, %s268, [#allocation9], 64, 64, 4
        $region36: #{tpu_custom_call.1} parent=11 // pred_fallthru
          _
        // Predicated region
        $region37: #{tpu_custom_call.1} parent=11 // pred_check
          %p274 = pneg %p190
        $region38: #{tpu_custom_call.1} parent=11 // pred_check_branch
          %276 = sbr.rel (%p274) target = $region40
        $region39: #{tpu_custom_call.1} parent=11 // pred_region
          _
        $region40: #{tpu_custom_call.1} parent=11 // pred_fallthru
          _
      $region12: #{tpu_custom_call.1} parent=5 // pred_fallthru
        _
      %p277 = scmp.lt.s32.totalorder %s17, 2
      // Predicated region
      $region41: #{tpu_custom_call.1} parent=5 // pred_check
        %p278 = pneg %p277
      $region42: #{tpu_custom_call.1} parent=5 // pred_check_branch
        %280 = sbr.rel (%p278) target = $region44
      $region43: #{tpu_custom_call.1} parent=5 // pred_region
        // Predicated region
        $region45: #{tpu_custom_call.1} parent=43 // pred_check
          %p281 = pneg %p37
        $region46: #{tpu_custom_call.1} parent=43 // pred_check_branch
          %283 = sbr.rel (%p281) target = $region48
        $region47: #{tpu_custom_call.1} parent=43 // pred_region
          %s284 = smul.u32 4, %s17
          %p285 = scmp.lt.s32.totalorder %s284, 7
          %s286 = scalar_select %p285, %s284, 7
          %s287 = smul.addr %s286, 4
          %s288 = scalar_lea.vmem %s0, %s287
          %s289 = smul.u32 4, %s17
        $region48: #{tpu_custom_call.1} parent=43 // pred_fallthru
          _
      $region44: #{tpu_custom_call.1} parent=5 // pred_fallthru
        _
      %p290 = scmp.le.s32.totalorder 1, %s17
      %p291 = scmp.lt.s32.totalorder %s17, 3
      %p292 = pnand %p290, %p291
      %p293 = pneg %p292
      // Predicated region
      $region49: #{tpu_custom_call.1} parent=5 // pred_check
        _
      $region50: #{tpu_custom_call.1} parent=5 // pred_check_branch
        %295 = sbr.rel (%p292) target = $region52
      $region51: #{tpu_custom_call.1} parent=5 // pred_region
        %s296 = ssub.s32 %s17, 1
        // Predicated region
        $region53: #{tpu_custom_call.1} parent=51 // pred_check
          %p297 = pneg %p85
        $region54: #{tpu_custom_call.1} parent=51 // pred_check_branch
          %299 = sbr.rel (%p297) target = $region56
        $region55: #{tpu_custom_call.1} parent=51 // pred_region
          %300 = dma.done [#allocation6], 4096
        $region56: #{tpu_custom_call.1} parent=51 // pred_fallthru
          _
        // Predicated region
        $region57: #{tpu_custom_call.1} parent=51 // pred_check
          %p301 = pneg %p127
        $region58: #{tpu_custom_call.1} parent=51 // pred_check_branch
          %303 = sbr.rel (%p301) target = $region60
        $region59: #{tpu_custom_call.1} parent=51 // pred_region
          %304 = dma.done [#allocation9], 1024
        $region60: #{tpu_custom_call.1} parent=51 // pred_fallthru
          _
        // Predicated region
        $region61: #{tpu_custom_call.1} parent=51 // pred_check
          %p305 = pneg %p169
        $region62: #{tpu_custom_call.1} parent=51 // pred_check_branch
          %307 = sbr.rel (%p305) target = $region64
        $region63: #{tpu_custom_call.1} parent=51 // pred_region
          %308 = dma.done [#allocation9], 1024
        $region64: #{tpu_custom_call.1} parent=51 // pred_fallthru
          _
        %s309 = smul.u32 4, %s22
        %p310 = scmp.lt.s32.totalorder %s309, 7
        %s311 = scalar_select %p310, %s309, 7
        %s312 = smul.addr %s311, 4
        %s313 = scalar_lea.vmem %s0, %s312
        %p314 = pneg %p43
        %p315 = pneg %p40
        %p316 = pneg %p64
        %p317 = pneg %p61
        %p318 = pneg %p85
        %p319 = pneg %p82
        %p320 = pneg %p106
        %p321 = pneg %p103
        %p322 = pneg %p127
        %p323 = pneg %p124
        %p324 = pneg %p148
        %p325 = pneg %p145
        %p326 = pneg %p169
        %p327 = pneg %p166
        %p328 = pneg %p190
        %p329 = pneg %p187
        %p330 = pneg %p211
        %p331 = pneg %p208
        %s332 = smul.u32 4, %s22
        %p333 = scmp.lt.s32.totalorder %s332, 7
        %s334 = scalar_select %p333, %s332, 7
        %s335 = smul.addr %s334, 4
        %s336 = scalar_lea.vmem %s0, %s335
        %s337 = smul.u32 4, %s22
        %p339 = scmp.eq.s32.totalorder %s22, 0
        // Predicated region
        $region65: #{tpu_custom_call.1} parent=51 // pred_check
          %p340 = pneg %p339
        $region66: #{tpu_custom_call.1} parent=51 // pred_check_branch
          %342 = sbr.rel (%p340) target = $region68
        $region67: #{tpu_custom_call.1} parent=51 // pred_region
          %343 = vst [vmem:[#allocation3] sm:$0xff] 0.0
          %344 = vst [vmem:[#allocation4] sm:$0xff] 0.0
        $region68: #{tpu_custom_call.1} parent=51 // pred_fallthru
          _
        %v345 = vld [vmem:[%s336] sm:$0xf]
        %v346 = vld [vmem:[%s336 + $0x4] sm:$0xf]
        %v347 = vld [vmem:[%s336 + $0x8] sm:$0xf]
        %v348 = vld [vmem:[%s336 + $0xc] sm:$0xf]
        %v349 = vld [vmem:[%s1] sm:$0xff]
        %v350 = vld [vmem:[%s1 + $0x8] sm:$0xff]
        %v351 = vld [vmem:[%s1 + $0x10] sm:$0xff]
        %v352 = vld [vmem:[%s1 + $0x18] sm:$0xff]
        %v353 = vld [vmem:[%s3] sm:$0xf]
        %v355 = vlaneseq
        %v356 = vshrl.u32 %v355, 7
        %v357 = vsub.s32 0, %v356
        %v358 = vrot.slane %v353, %v357
        %v359 = vlaneseq
        %v360 = vshrl.u32 %v359, 7
        %v361 = vsub.s32 1, %v360
        %v362 = vrot.slane %v353, %v361
        %v363 = vlaneseq
        %v364 = vshrl.u32 %v363, 7
        %v365 = vsub.s32 2, %v364
        %v366 = vrot.slane %v353, %v365
        %v367 = vlaneseq
        %v368 = vshrl.u32 %v367, 7
        %v369 = vsub.s32 3, %v368
        %v370 = vrot.slane %v353, %v369
        %v379 = vunpack.c.l.b16 %v345
        %v380 = vunpack.c.l.b16 %v346
        %v381 = vunpack.c.l.b16 %v347
        %v382 = vunpack.c.l.b16 %v348
        %v383 = vpack.c.b16 %v380, %v379
        %v384 = vpack.c.b16 %v382, %v381
        %v389 = vunpack.c.l.b16 %v349
        %v390 = vunpack.c.h.b16 %v349
        %v391 = vunpack.c.l.b16 %v350
        %v392 = vunpack.c.h.b16 %v350
        %v393 = vunpack.c.l.b16 %v351
        %v394 = vunpack.c.h.b16 %v351
        %v395 = vunpack.c.l.b16 %v352
        %v396 = vunpack.c.h.b16 %v352
        %v397 = vpack.c.b16 %v393, %v389
        %v398 = vpack.c.b16 %v394, %v390
        %v399 = vpack.c.b16 %v395, %v391
        %v400 = vpack.c.b16 %v396, %v392
        %vm405 = vcmask 130048
        %v407 = vsel %vm405, %v383, 0
        %v410 = vsel %vm405, %v384, 0
        %412 = vmatprep.subr.bf16.mxu0 %v398
        %413 = vmatpush1.bf16.msra.mxu0 %v397
        %414 = vmatprep.subr.bf16.mxu0 0
        %415 = vmatpush1.bf16.msra.mxu0 0
        %416 = vmatprep.subr.bf16.mxu0 0
        %417 = vmatpush1.bf16.msra.mxu0 0
        %418 = vmatprep.subr.bf16.mxu0 0
        %419 = vmatpush1.bf16.msra.mxu0 0
        %420 = vmatprep.subr.bf16.mxu0 0
        %421 = vmatpush1.bf16.msra.mxu0 0
        %422 = vmatprep.subr.bf16.mxu0 0
        %423 = vmatpush1.bf16.msra.mxu0 0
        %424 = vmatprep.subr.bf16.mxu0 0
        %425 = vmatpush1.bf16.msra.mxu0 0
        %426 = vmatprep.subr.bf16.mxu0 0
        %427 = vmatpush1.bf16.msra.mxu0 0
        %428 = vmatprep.subr.bf16.mxu0 0
        %429 = vmatpush1.bf16.msra.mxu0 0
        %430 = vmatprep.subr.bf16.mxu0 0
        %431 = vmatpush1.bf16.msra.mxu0 0
        %432 = vmatprep.subr.bf16.mxu0 0
        %433 = vmatpush1.bf16.msra.mxu0 0
        %434 = vmatprep.subr.bf16.mxu0 0
        %435 = vmatpush1.bf16.msra.mxu0 0
        %436 = vmatprep.subr.bf16.mxu0 0
        %437 = vmatpush1.bf16.msra.mxu0 0
        %438 = vmatprep.subr.bf16.mxu0 0
        %439 = vmatpush1.bf16.msra.mxu0 0
        %440 = vmatprep.subr.bf16.mxu0 0
        %441 = vmatpush1.bf16.msra.mxu0 0
        %442 = vmatprep.subr.bf16.mxu0 0
        %443 = vmatpush1.bf16.msra.mxu0 0
        %444 = vmatprep.mubr.bf16.mxu0 0
        %445 = vmatmul.mubr.bf16.gmra.mrb[0].mxu0 %v407
        %v446 = vpop.f32.mrb[0].mxu0
        %v447 = vadd.f32 %v358, %v446
        %v448 = vpop.f32.mrb[0].mxu0
        %v449 = vadd.f32 %v362, %v448
        %v450 = vpop.f32.mrb[0].mxu0
        %v451 = vadd.f32 %v358, %v450
        %v452 = vpop.f32.mrb[0].mxu0
        %v453 = vadd.f32 %v362, %v452
        %454 = vmatprep.mubr.bf16.mxu0 0
        %455 = vmatmul.mubr.bf16.gmra.mrb[0].mxu0 %v410
        %v456 = vpop.f32.mrb[0].mxu0
        %v457 = vadd.f32 %v358, %v456
        %v458 = vpop.f32.mrb[0].mxu0
        %v459 = vadd.f32 %v362, %v458
        %v460 = vpop.f32.mrb[0].mxu0
        %v461 = vadd.f32 %v358, %v460
        %v462 = vpop.f32.mrb[0].mxu0
        %v463 = vadd.f32 %v362, %v462
        %464 = vdwg.mxu0
        %465 = vmatprep.subr.bf16.mxu0 %v400
        %466 = vmatpush1.bf16.msra.mxu0 %v399
        %467 = vmatprep.subr.bf16.mxu0 0
        %468 = vmatpush1.bf16.msra.mxu0 0
        %469 = vmatprep.subr.bf16.mxu0 0
        %470 = vmatpush1.bf16.msra.mxu0 0
        %471 = vmatprep.subr.bf16.mxu0 0
        %472 = vmatpush1.bf16.msra.mxu0 0
        %473 = vmatprep.subr.bf16.mxu0 0
        %474 = vmatpush1.bf16.msra.mxu0 0
        %475 = vmatprep.subr.bf16.mxu0 0
        %476 = vmatpush1.bf16.msra.mxu0 0
        %477 = vmatprep.subr.bf16.mxu0 0
        %478 = vmatpush1.bf16.msra.mxu0 0
        %479 = vmatprep.subr.bf16.mxu0 0
        %480 = vmatpush1.bf16.msra.mxu0 0
        %481 = vmatprep.subr.bf16.mxu0 0
        %482 = vmatpush1.bf16.msra.mxu0 0
        %483 = vmatprep.subr.bf16.mxu0 0
        %484 = vmatpush1.bf16.msra.mxu0 0
        %485 = vmatprep.subr.bf16.mxu0 0
        %486 = vmatpush1.bf16.msra.mxu0 0
        %487 = vmatprep.subr.bf16.mxu0 0
        %488 = vmatpush1.bf16.msra.mxu0 0
        %489 = vmatprep.subr.bf16.mxu0 0
        %490 = vmatpush1.bf16.msra.mxu0 0
        %491 = vmatprep.subr.bf16.mxu0 0
        %492 = vmatpush1.bf16.msra.mxu0 0
        %493 = vmatprep.subr.bf16.mxu0 0
        %494 = vmatpush1.bf16.msra.mxu0 0
        %495 = vmatprep.subr.bf16.mxu0 0
        %496 = vmatpush1.bf16.msra.mxu0 0
        %497 = vmatprep.mubr.bf16.mxu0 0
        %498 = vmatmul.mubr.bf16.gmra.mrb[0].mxu0 %v407
        %v499 = vpop.f32.mrb[0].mxu0
        %v500 = vadd.f32 %v366, %v499
        %v501 = vpop.f32.mrb[0].mxu0
        %v502 = vadd.f32 %v370, %v501
        %v503 = vpop.f32.mrb[0].mxu0
        %v504 = vadd.f32 %v366, %v503
        %v505 = vpop.f32.mrb[0].mxu0
        %v506 = vadd.f32 %v370, %v505
        %507 = vmatprep.mubr.bf16.mxu0 0
        %508 = vmatmul.mubr.bf16.gmra.mrb[0].mxu0 %v410
        %v509 = vpop.f32.mrb[0].mxu0
        %v510 = vadd.f32 %v366, %v509
        %v511 = vpop.f32.mrb[0].mxu0
        %v512 = vadd.f32 %v370, %v511
        %v513 = vpop.f32.mrb[0].mxu0
        %v514 = vadd.f32 %v366, %v513
        %v515 = vpop.f32.mrb[0].mxu0
        %v516 = vadd.f32 %v370, %v515
        %517 = vdwg.mxu0
        %518 = vst [vmem:[#allocation2] sm:$0xff] %v447
        %519 = vst [vmem:[#allocation2 + $0x8] sm:$0xff] %v449
        %520 = vst [vmem:[#allocation2 + $0x10] sm:$0xff] %v500
        %521 = vst [vmem:[#allocation2 + $0x18] sm:$0xff] %v502
        %522 = vst [vmem:[#allocation2 + $0x20] sm:$0xff] %v451
        %523 = vst [vmem:[#allocation2 + $0x28] sm:$0xff] %v453
        %524 = vst [vmem:[#allocation2 + $0x30] sm:$0xff] %v504
        %525 = vst [vmem:[#allocation2 + $0x38] sm:$0xff] %v506
        %526 = vst [vmem:[#allocation2 + $0x40] sm:$0xff] %v457
        %527 = vst [vmem:[#allocation2 + $0x48] sm:$0xff] %v459
        %528 = vst [vmem:[#allocation2 + $0x50] sm:$0xff] %v510
        %529 = vst [vmem:[#allocation2 + $0x58] sm:$0xff] %v512
        %530 = vst [vmem:[#allocation2 + $0x60] sm:$0xff] %v461
        %531 = vst [vmem:[#allocation2 + $0x68] sm:$0xff] %v463
        %532 = vst [vmem:[#allocation2 + $0x70] sm:$0xff] %v514
        %533 = vst [vmem:[#allocation2 + $0x78] sm:$0xff] %v516
        %v534 = vld [vmem:[#allocation5] sm:$0xff]
        %v535 = vld [vmem:[#allocation5 + $0x8] sm:$0xff]
        %v536 = vld [vmem:[#allocation5 + $0x10] sm:$0xff]
        %v537 = vld [vmem:[#allocation5 + $0x18] sm:$0xff]
        %v538 = vld [vmem:[#allocation5 + $0x20] sm:$0xff]
        %v539 = vld [vmem:[#allocation5 + $0x28] sm:$0xff]
        %v540 = vld [vmem:[#allocation5 + $0x30] sm:$0xff]
        %v541 = vld [vmem:[#allocation5 + $0x38] sm:$0xff]
        %v542 = vld [vmem:[#allocation5 + $0x40] sm:$0xff]
        %v543 = vld [vmem:[#allocation5 + $0x48] sm:$0xff]
        %v544 = vld [vmem:[#allocation5 + $0x50] sm:$0xff]
        %v545 = vld [vmem:[#allocation5 + $0x58] sm:$0xff]
        %v546 = vld [vmem:[#allocation5 + $0x60] sm:$0xff]
        %v547 = vld [vmem:[#allocation5 + $0x68] sm:$0xff]
        %v548 = vld [vmem:[#allocation5 + $0x70] sm:$0xff]
        %v549 = vld [vmem:[#allocation5 + $0x78] sm:$0xff]
        %v550 = vld [vmem:[#allocation5 + $0x80] sm:$0xff]
        %v551 = vld [vmem:[#allocation5 + $0x88] sm:$0xff]
        %v552 = vld [vmem:[#allocation5 + $0x90] sm:$0xff]
        %v553 = vld [vmem:[#allocation5 + $0x98] sm:$0xff]
        %v554 = vld [vmem:[#allocation5 + $0xa0] sm:$0xff]
        %v555 = vld [vmem:[#allocation5 + $0xa8] sm:$0xff]
        %v556 = vld [vmem:[#allocation5 + $0xb0] sm:$0xff]
        %v557 = vld [vmem:[#allocation5 + $0xb8] sm:$0xff]
        %v558 = vld [vmem:[#allocation5 + $0xc0] sm:$0xff]
        %v559 = vld [vmem:[#allocation5 + $0xc8] sm:$0xff]
        %v560 = vld [vmem:[#allocation5 + $0xd0] sm:$0xff]
        %v561 = vld [vmem:[#allocation5 + $0xd8] sm:$0xff]
        %v562 = vld [vmem:[#allocation5 + $0xe0] sm:$0xff]
        %v563 = vld [vmem:[#allocation5 + $0xe8] sm:$0xff]
        %v564 = vld [vmem:[#allocation5 + $0xf0] sm:$0xff]
        %v565 = vld [vmem:[#allocation5 + $0xf8] sm:$0xff]
        %v566 = vld [vmem:[#allocation3] sm:$0xff]
        %v567 = vld [vmem:[#allocation4] sm:$0xff]
        %v568 = vld [vmem:[#allocation2] sm:$0xff]
        %v569 = vld [vmem:[#allocation2 + $0x8] sm:$0xff]
        %v570 = vld [vmem:[#allocation2 + $0x10] sm:$0xff]
        %v571 = vld [vmem:[#allocation2 + $0x18] sm:$0xff]
        %v572 = vpack.c.bf16 %v566, %v566
        %v605 = vunpack.c.l.b16 %v534
        %v606 = vunpack.c.h.b16 %v534
        %v607 = vunpack.c.l.b16 %v535
        %v608 = vunpack.c.h.b16 %v535
        %v609 = vunpack.c.l.b16 %v536
        %v610 = vunpack.c.h.b16 %v536
        %v611 = vunpack.c.l.b16 %v537
        %v612 = vunpack.c.h.b16 %v537
        %v613 = vunpack.c.l.b16 %v538
        %v614 = vunpack.c.h.b16 %v538
        %v615 = vunpack.c.l.b16 %v539
        %v616 = vunpack.c.h.b16 %v539
        %v617 = vunpack.c.l.b16 %v540
        %v618 = vunpack.c.h.b16 %v540
        %v619 = vunpack.c.l.b16 %v541
        %v620 = vunpack.c.h.b16 %v541
        %v621 = vunpack.c.l.b16 %v542
        %v622 = vunpack.c.h.b16 %v542
        %v623 = vunpack.c.l.b16 %v543
        %v624 = vunpack.c.h.b16 %v543
        %v625 = vunpack.c.l.b16 %v544
        %v626 = vunpack.c.h.b16 %v544
        %v627 = vunpack.c.l.b16 %v545
        %v628 = vunpack.c.h.b16 %v545
        %v629 = vunpack.c.l.b16 %v546
        %v630 = vunpack.c.h.b16 %v546
        %v631 = vunpack.c.l.b16 %v547
        %v632 = vunpack.c.h.b16 %v547
        %v633 = vunpack.c.l.b16 %v548
        %v634 = vunpack.c.h.b16 %v548
        %v635 = vunpack.c.l.b16 %v549
        %v636 = vunpack.c.h.b16 %v549
        %v637 = vunpack.c.l.b16 %v550
        %v638 = vunpack.c.h.b16 %v550
        %v639 = vunpack.c.l.b16 %v551
        %v640 = vunpack.c.h.b16 %v551
        %v641 = vunpack.c.l.b16 %v552
        %v642 = vunpack.c.h.b16 %v552
        %v643 = vunpack.c.l.b16 %v553
        %v644 = vunpack.c.h.b16 %v553
        %v645 = vunpack.c.l.b16 %v554
        %v646 = vunpack.c.h.b16 %v554
        %v647 = vunpack.c.l.b16 %v555
        %v648 = vunpack.c.h.b16 %v555
        %v649 = vunpack.c.l.b16 %v556
        %v650 = vunpack.c.h.b16 %v556
        %v651 = vunpack.c.l.b16 %v557
        %v652 = vunpack.c.h.b16 %v557
        %v653 = vunpack.c.l.b16 %v558
        %v654 = vunpack.c.h.b16 %v558
        %v655 = vunpack.c.l.b16 %v559
        %v656 = vunpack.c.h.b16 %v559
        %v657 = vunpack.c.l.b16 %v560
        %v658 = vunpack.c.h.b16 %v560
        %v659 = vunpack.c.l.b16 %v561
        %v660 = vunpack.c.h.b16 %v561
        %v661 = vunpack.c.l.b16 %v562
        %v662 = vunpack.c.h.b16 %v562
        %v663 = vunpack.c.l.b16 %v563
        %v664 = vunpack.c.h.b16 %v563
        %v665 = vunpack.c.l.b16 %v564
        %v666 = vunpack.c.h.b16 %v564
        %v667 = vunpack.c.l.b16 %v565
        %v668 = vunpack.c.h.b16 %v565
        %v669 = vpack.c.b16 %v609, %v605
        %v670 = vpack.c.b16 %v610, %v606
        %v671 = vpack.c.b16 %v611, %v607
        %v672 = vpack.c.b16 %v612, %v608
        %v673 = vpack.c.b16 %v617, %v613
        %v674 = vpack.c.b16 %v618, %v614
        %v675 = vpack.c.b16 %v619, %v615
        %v676 = vpack.c.b16 %v620, %v616
        %v677 = vpack.c.b16 %v625, %v621
        %v678 = vpack.c.b16 %v626, %v622
        %v679 = vpack.c.b16 %v627, %v623
        %v680 = vpack.c.b16 %v628, %v624
        %v681 = vpack.c.b16 %v633, %v629
        %v682 = vpack.c.b16 %v634, %v630
        %v683 = vpack.c.b16 %v635, %v631
        %v684 = vpack.c.b16 %v636, %v632
        %v685 = vpack.c.b16 %v641, %v637
        %v686 = vpack.c.b16 %v642, %v638
        %v687 = vpack.c.b16 %v643, %v639
        %v688 = vpack.c.b16 %v644, %v640
        %v689 = vpack.c.b16 %v649, %v645
        %v690 = vpack.c.b16 %v650, %v646
        %v691 = vpack.c.b16 %v651, %v647
        %v692 = vpack.c.b16 %v652, %v648
        %v693 = vpack.c.b16 %v657, %v653
        %v694 = vpack.c.b16 %v658, %v654
        %v695 = vpack.c.b16 %v659, %v655
        %v696 = vpack.c.b16 %v660, %v656
        %v697 = vpack.c.b16 %v665, %v661
        %v698 = vpack.c.b16 %v666, %v662
        %v699 = vpack.c.b16 %v667, %v663
        %v700 = vpack.c.b16 %v668, %v664
        %733 = vmatprep.subr.bf16.mxu0 %v670
        %734 = vmatpush1.bf16.msra.mxu0 %v669
        %735 = vmatprep.subr.bf16.mxu0 %v674
        %736 = vmatpush1.bf16.msra.mxu0 %v673
        %737 = vmatprep.subr.bf16.mxu0 %v678
        %738 = vmatpush1.bf16.msra.mxu0 %v677
        %739 = vmatprep.subr.bf16.mxu0 %v682
        %740 = vmatpush1.bf16.msra.mxu0 %v681
        %741 = vmatprep.subr.bf16.mxu0 %v686
        %742 = vmatpush1.bf16.msra.mxu0 %v685
        %743 = vmatprep.subr.bf16.mxu0 %v690
        %744 = vmatpush1.bf16.msra.mxu0 %v689
        %745 = vmatprep.subr.bf16.mxu0 %v694
        %746 = vmatpush1.bf16.msra.mxu0 %v693
        %747 = vmatprep.subr.bf16.mxu0 %v698
        %748 = vmatpush1.bf16.msra.mxu0 %v697
        %749 = vmatprep.subr.bf16.mxu0 0
        %750 = vmatpush1.bf16.msra.mxu0 0
        %751 = vmatprep.subr.bf16.mxu0 0
        %752 = vmatpush1.bf16.msra.mxu0 0
        %753 = vmatprep.subr.bf16.mxu0 0
        %754 = vmatpush1.bf16.msra.mxu0 0
        %755 = vmatprep.subr.bf16.mxu0 0
        %756 = vmatpush1.bf16.msra.mxu0 0
        %757 = vmatprep.subr.bf16.mxu0 0
        %758 = vmatpush1.bf16.msra.mxu0 0
        %759 = vmatprep.subr.bf16.mxu0 0
        %760 = vmatpush1.bf16.msra.mxu0 0
        %761 = vmatprep.subr.bf16.mxu0 0
        %762 = vmatpush1.bf16.msra.mxu0 0
        %763 = vmatprep.subr.bf16.mxu0 0
        %764 = vmatpush1.bf16.msra.mxu0 0
        %765 = vmatprep.mubr.bf16.mxu0 0
        %766 = vmatmul.mubr.bf16.gmra.mrb[0].mxu0 %v572
        %v767 = vpop.f32.mrb[0].mxu0
        %v768 = vadd.f32 0.0, %v767
        %v769 = vpop.f32.mrb[0].mxu0
        %v770 = vadd.f32 0.0, %v769
        %v771 = vpop.f32.mrb[0].mxu0
        %v772 = vpop.f32.mrb[0].mxu0
        %773 = vdwg.mxu0
        %774 = vmatprep.subr.bf16.mxu0 %v672
        %775 = vmatpush1.bf16.msra.mxu0 %v671
        %776 = vmatprep.subr.bf16.mxu0 %v676
        %777 = vmatpush1.bf16.msra.mxu0 %v675
        %778 = vmatprep.subr.bf16.mxu0 %v680
        %779 = vmatpush1.bf16.msra.mxu0 %v679
        %780 = vmatprep.subr.bf16.mxu0 %v684
        %781 = vmatpush1.bf16.msra.mxu0 %v683
        %782 = vmatprep.subr.bf16.mxu0 %v688
        %783 = vmatpush1.bf16.msra.mxu0 %v687
        %784 = vmatprep.subr.bf16.mxu0 %v692
        %785 = vmatpush1.bf16.msra.mxu0 %v691
        %786 = vmatprep.subr.bf16.mxu0 %v696
        %787 = vmatpush1.bf16.msra.mxu0 %v695
        %788 = vmatprep.subr.bf16.mxu0 %v700
        %789 = vmatpush1.bf16.msra.mxu0 %v699
        %790 = vmatprep.subr.bf16.mxu0 0
        %791 = vmatpush1.bf16.msra.mxu0 0
        %792 = vmatprep.subr.bf16.mxu0 0
        %793 = vmatpush1.bf16.msra.mxu0 0
        %794 = vmatprep.subr.bf16.mxu0 0
        %795 = vmatpush1.bf16.msra.mxu0 0
        %796 = vmatprep.subr.bf16.mxu0 0
        %797 = vmatpush1.bf16.msra.mxu0 0
        %798 = vmatprep.subr.bf16.mxu0 0
        %799 = vmatpush1.bf16.msra.mxu0 0
        %800 = vmatprep.subr.bf16.mxu0 0
        %801 = vmatpush1.bf16.msra.mxu0 0
        %802 = vmatprep.subr.bf16.mxu0 0
        %803 = vmatpush1.bf16.msra.mxu0 0
        %804 = vmatprep.subr.bf16.mxu0 0
        %805 = vmatpush1.bf16.msra.mxu0 0
        %806 = vmatprep.mubr.bf16.mxu0 0
        %807 = vmatmul.mubr.bf16.gmra.mrb[0].mxu0 %v572
        %v808 = vpop.f32.mrb[0].mxu0
        %v809 = vadd.f32 0.0, %v808
        %v810 = vpop.f32.mrb[0].mxu0
        %v811 = vadd.f32 0.0, %v810
        %v812 = vpop.f32.mrb[0].mxu0
        %v813 = vpop.f32.mrb[0].mxu0
        %814 = vdwg.mxu0
        %v815 = vadd.f32 %v568, %v768
        %v816 = vadd.f32 %v569, %v770
        %v817 = vadd.f32 %v570, %v809
        %v818 = vadd.f32 %v571, %v811
        %v819 = vxor.u32 %v815, 2147483648
        %v820 = vmul.f32 %v819, 1.442695
        %v821 = vpow.pop %v820
        %v822 = vadd.f32 %v821, 1.0
        %v823 = vrcp.pop %v822
        %v824 = vmul.f32 1.0, %v823
        %v825 = vxor.u32 %v816, 2147483648
        %v826 = vmul.f32 %v825, 1.442695
        %v827 = vpow.pop %v826
        %v828 = vadd.f32 %v827, 1.0
        %v829 = vrcp.pop %v828
        %v830 = vmul.f32 1.0, %v829
        %v831 = vtanh.pop %v817
        %v832 = vxor.u32 %v818, 2147483648
        %v833 = vmul.f32 %v832, 1.442695
        %v834 = vpow.pop %v833
        %v835 = vadd.f32 %v834, 1.0
        %v836 = vrcp.pop %v835
        %v837 = vmul.f32 1.0, %v836
        %v838 = vmul.f32 %v830, %v567
        %v839 = vmul.f32 %v824, %v831
        %v840 = vadd.f32 %v838, %v839
        %v841 = vtanh.pop %v840
        %v842 = vmul.f32 %v837, %v841
        %v843 = vld [vmem:[#allocation2 + $0x20] sm:$0xff]
        %v844 = vld [vmem:[#allocation2 + $0x28] sm:$0xff]
        %v845 = vld [vmem:[#allocation2 + $0x30] sm:$0xff]
        %v846 = vld [vmem:[#allocation2 + $0x38] sm:$0xff]
        %v847 = vpack.c.bf16 %v842, %v842
        %848 = vmatprep.subr.bf16.mxu0 %v670
        %849 = vmatpush1.bf16.msra.mxu0 %v669
        %850 = vmatprep.subr.bf16.mxu0 %v674
        %851 = vmatpush1.bf16.msra.mxu0 %v673
        %852 = vmatprep.subr.bf16.mxu0 %v678
        %853 = vmatpush1.bf16.msra.mxu0 %v677
        %854 = vmatprep.subr.bf16.mxu0 %v682
        %855 = vmatpush1.bf16.msra.mxu0 %v681
        %856 = vmatprep.subr.bf16.mxu0 %v686
        %857 = vmatpush1.bf16.msra.mxu0 %v685
        %858 = vmatprep.subr.bf16.mxu0 %v690
        %859 = vmatpush1.bf16.msra.mxu0 %v689
        %860 = vmatprep.subr.bf16.mxu0 %v694
        %861 = vmatpush1.bf16.msra.mxu0 %v693
        %862 = vmatprep.subr.bf16.mxu0 %v698
        %863 = vmatpush1.bf16.msra.mxu0 %v697
        %864 = vmatprep.subr.bf16.mxu0 0
        %865 = vmatpush1.bf16.msra.mxu0 0
        %866 = vmatprep.subr.bf16.mxu0 0
        %867 = vmatpush1.bf16.msra.mxu0 0
        %868 = vmatprep.subr.bf16.mxu0 0
        %869 = vmatpush1.bf16.msra.mxu0 0
        %870 = vmatprep.subr.bf16.mxu0 0
        %871 = vmatpush1.bf16.msra.mxu0 0
        %872 = vmatprep.subr.bf16.mxu0 0
        %873 = vmatpush1.bf16.msra.mxu0 0
        %874 = vmatprep.subr.bf16.mxu0 0
        %875 = vmatpush1.bf16.msra.mxu0 0
        %876 = vmatprep.subr.bf16.mxu0 0
        %877 = vmatpush1.bf16.msra.mxu0 0
        %878 = vmatprep.subr.bf16.mxu0 0
        %879 = vmatpush1.bf16.msra.mxu0 0
        %880 = vmatprep.mubr.bf16.mxu0 0
        %881 = vmatmul.mubr.bf16.gmra.mrb[0].mxu0 %v847
        %v882 = vpop.f32.mrb[0].mxu0
        %v883 = vadd.f32 0.0, %v882
        %v884 = vpop.f32.mrb[0].mxu0
        %v885 = vadd.f32 0.0, %v884
        %v886 = vpop.f32.mrb[0].mxu0
        %v887 = vpop.f32.mrb[0].mxu0
        %888 = vdwg.mxu0
        %889 = vmatprep.subr.bf16.mxu0 %v672
        %890 = vmatpush1.bf16.msra.mxu0 %v671
        %891 = vmatprep.subr.bf16.mxu0 %v676
        %892 = vmatpush1.bf16.msra.mxu0 %v675
        %893 = vmatprep.subr.bf16.mxu0 %v680
        %894 = vmatpush1.bf16.msra.mxu0 %v679
        %895 = vmatprep.subr.bf16.mxu0 %v684
        %896 = vmatpush1.bf16.msra.mxu0 %v683
        %897 = vmatprep.subr.bf16.mxu0 %v688
        %898 = vmatpush1.bf16.msra.mxu0 %v687
        %899 = vmatprep.subr.bf16.mxu0 %v692
        %900 = vmatpush1.bf16.msra.mxu0 %v691
        %901 = vmatprep.subr.bf16.mxu0 %v696
        %902 = vmatpush1.bf16.msra.mxu0 %v695
        %903 = vmatprep.subr.bf16.mxu0 %v700
        %904 = vmatpush1.bf16.msra.mxu0 %v699
        %905 = vmatprep.subr.bf16.mxu0 0
        %906 = vmatpush1.bf16.msra.mxu0 0
        %907 = vmatprep.subr.bf16.mxu0 0
        %908 = vmatpush1.bf16.msra.mxu0 0
        %909 = vmatprep.subr.bf16.mxu0 0
        %910 = vmatpush1.bf16.msra.mxu0 0
        %911 = vmatprep.subr.bf16.mxu0 0
        %912 = vmatpush1.bf16.msra.mxu0 0
        %913 = vmatprep.subr.bf16.mxu0 0
        %914 = vmatpush1.bf16.msra.mxu0 0
        %915 = vmatprep.subr.bf16.mxu0 0
        %916 = vmatpush1.bf16.msra.mxu0 0
        %917 = vmatprep.subr.bf16.mxu0 0
        %918 = vmatpush1.bf16.msra.mxu0 0
        %919 = vmatprep.subr.bf16.mxu0 0
        %920 = vmatpush1.bf16.msra.mxu0 0
        %921 = vmatprep.mubr.bf16.mxu0 0
        %922 = vmatmul.mubr.bf16.gmra.mrb[0].mxu0 %v847
        %v923 = vpop.f32.mrb[0].mxu0
        %v924 = vadd.f32 0.0, %v923
        %v925 = vpop.f32.mrb[0].mxu0
        %v926 = vadd.f32 0.0, %v925
        %v927 = vpop.f32.mrb[0].mxu0
        %v928 = vpop.f32.mrb[0].mxu0
        %929 = vdwg.mxu0
        %v930 = vadd.f32 %v843, %v883
        %v931 = vadd.f32 %v844, %v885
        %v932 = vadd.f32 %v845, %v924
        %v933 = vadd.f32 %v846, %v926
        %v934 = vxor.u32 %v930, 2147483648
        %v935 = vmul.f32 %v934, 1.442695
        %v936 = vpow.pop %v935
        %v937 = vadd.f32 %v936, 1.0
        %v938 = vrcp.pop %v937
        %v939 = vmul.f32 1.0, %v938
        %v940 = vxor.u32 %v931, 2147483648
        %v941 = vmul.f32 %v940, 1.442695
        %v942 = vpow.pop %v941
        %v943 = vadd.f32 %v942, 1.0
        %v944 = vrcp.pop %v943
        %v945 = vmul.f32 1.0, %v944
        %v946 = vtanh.pop %v932
        %v947 = vxor.u32 %v933, 2147483648
        %v948 = vmul.f32 %v947, 1.442695
        %v949 = vpow.pop %v948
        %v950 = vadd.f32 %v949, 1.0
        %v951 = vrcp.pop %v950
        %v952 = vmul.f32 1.0, %v951
        %v953 = vmul.f32 %v945, %v840
        %v954 = vmul.f32 %v939, %v946
        %v955 = vadd.f32 %v953, %v954
        %v956 = vtanh.pop %v955
        %v957 = vmul.f32 %v952, %v956
        %v958 = vld [vmem:[#allocation2 + $0x40] sm:$0xff]
        %v959 = vld [vmem:[#allocation2 + $0x48] sm:$0xff]
        %v960 = vld [vmem:[#allocation2 + $0x50] sm:$0xff]
        %v961 = vld [vmem:[#allocation2 + $0x58] sm:$0xff]
        %v962 = vpack.c.bf16 %v957, %v957
        %963 = vmatprep.subr.bf16.mxu0 %v670
        %964 = vmatpush1.bf16.msra.mxu0 %v669
        %965 = vmatprep.subr.bf16.mxu0 %v674
        %966 = vmatpush1.bf16.msra.mxu0 %v673
        %967 = vmatprep.subr.bf16.mxu0 %v678
        %968 = vmatpush1.bf16.msra.mxu0 %v677
        %969 = vmatprep.subr.bf16.mxu0 %v682
        %970 = vmatpush1.bf16.msra.mxu0 %v681
        %971 = vmatprep.subr.bf16.mxu0 %v686
        %972 = vmatpush1.bf16.msra.mxu0 %v685
        %973 = vmatprep.subr.bf16.mxu0 %v690
        %974 = vmatpush1.bf16.msra.mxu0 %v689
        %975 = vmatprep.subr.bf16.mxu0 %v694
        %976 = vmatpush1.bf16.msra.mxu0 %v693
        %977 = vmatprep.subr.bf16.mxu0 %v698
        %978 = vmatpush1.bf16.msra.mxu0 %v697
        %979 = vmatprep.subr.bf16.mxu0 0
        %980 = vmatpush1.bf16.msra.mxu0 0
        %981 = vmatprep.subr.bf16.mxu0 0
        %982 = vmatpush1.bf16.msra.mxu0 0
        %983 = vmatprep.subr.bf16.mxu0 0
        %984 = vmatpush1.bf16.msra.mxu0 0
        %985 = vmatprep.subr.bf16.mxu0 0
        %986 = vmatpush1.bf16.msra.mxu0 0
        %987 = vmatprep.subr.bf16.mxu0 0
        %988 = vmatpush1.bf16.msra.mxu0 0
        %989 = vmatprep.subr.bf16.mxu0 0
        %990 = vmatpush1.bf16.msra.mxu0 0
        %991 = vmatprep.subr.bf16.mxu0 0
        %992 = vmatpush1.bf16.msra.mxu0 0
        %993 = vmatprep.subr.bf16.mxu0 0
        %994 = vmatpush1.bf16.msra.mxu0 0
        %995 = vmatprep.mubr.bf16.mxu0 0
        %996 = vmatmul.mubr.bf16.gmra.mrb[0].mxu0 %v962
        %v997 = vpop.f32.mrb[0].mxu0
        %v998 = vadd.f32 0.0, %v997
        %v999 = vpop.f32.mrb[0].mxu0
        %v1000 = vadd.f32 0.0, %v999
        %v1001 = vpop.f32.mrb[0].mxu0
        %v1002 = vpop.f32.mrb[0].mxu0
        %1003 = vdwg.mxu0
        %1004 = vmatprep.subr.bf16.mxu0 %v672
        %1005 = vmatpush1.bf16.msra.mxu0 %v671
        %1006 = vmatprep.subr.bf16.mxu0 %v676
        %1007 = vmatpush1.bf16.msra.mxu0 %v675
        %1008 = vmatprep.subr.bf16.mxu0 %v680
        %1009 = vmatpush1.bf16.msra.mxu0 %v679
        %1010 = vmatprep.subr.bf16.mxu0 %v684
        %1011 = vmatpush1.bf16.msra.mxu0 %v683
        %1012 = vmatprep.subr.bf16.mxu0 %v688
        %1013 = vmatpush1.bf16.msra.mxu0 %v687
        %1014 = vmatprep.subr.bf16.mxu0 %v692
        %1015 = vmatpush1.bf16.msra.mxu0 %v691
        %1016 = vmatprep.subr.bf16.mxu0 %v696
        %1017 = vmatpush1.bf16.msra.mxu0 %v695
        %1018 = vmatprep.subr.bf16.mxu0 %v700
        %1019 = vmatpush1.bf16.msra.mxu0 %v699
        %1020 = vmatprep.subr.bf16.mxu0 0
        %1021 = vmatpush1.bf16.msra.mxu0 0
        %1022 = vmatprep.subr.bf16.mxu0 0
        %1023 = vmatpush1.bf16.msra.mxu0 0
        %1024 = vmatprep.subr.bf16.mxu0 0
        %1025 = vmatpush1.bf16.msra.mxu0 0
        %1026 = vmatprep.subr.bf16.mxu0 0
        %1027 = vmatpush1.bf16.msra.mxu0 0
        %1028 = vmatprep.subr.bf16.mxu0 0
        %1029 = vmatpush1.bf16.msra.mxu0 0
        %1030 = vmatprep.subr.bf16.mxu0 0
        %1031 = vmatpush1.bf16.msra.mxu0 0
        %1032 = vmatprep.subr.bf16.mxu0 0
        %1033 = vmatpush1.bf16.msra.mxu0 0
        %1034 = vmatprep.subr.bf16.mxu0 0
        %1035 = vmatpush1.bf16.msra.mxu0 0
        %1036 = vmatprep.mubr.bf16.mxu0 0
        %1037 = vmatmul.mubr.bf16.gmra.mrb[0].mxu0 %v962
        %v1038 = vpop.f32.mrb[0].mxu0
        %v1039 = vadd.f32 0.0, %v1038
        %v1040 = vpop.f32.mrb[0].mxu0
        %v1041 = vadd.f32 0.0, %v1040
        %v1042 = vpop.f32.mrb[0].mxu0
        %v1043 = vpop.f32.mrb[0].mxu0
        %1044 = vdwg.mxu0
        %v1045 = vadd.f32 %v958, %v998
        %v1046 = vadd.f32 %v959, %v1000
        %v1047 = vadd.f32 %v960, %v1039
        %v1048 = vadd.f32 %v961, %v1041
        %v1049 = vxor.u32 %v1045, 2147483648
        %v1050 = vmul.f32 %v1049, 1.442695
        %v1051 = vpow.pop %v1050
        %v1052 = vadd.f32 %v1051, 1.0
        %v1053 = vrcp.pop %v1052
        %v1054 = vmul.f32 1.0, %v1053
        %v1055 = vxor.u32 %v1046, 2147483648
        %v1056 = vmul.f32 %v1055, 1.442695
        %v1057 = vpow.pop %v1056
        %v1058 = vadd.f32 %v1057, 1.0
        %v1059 = vrcp.pop %v1058
        %v1060 = vmul.f32 1.0, %v1059
        %v1061 = vtanh.pop %v1047
        %v1062 = vxor.u32 %v1048, 2147483648
        %v1063 = vmul.f32 %v1062, 1.442695
        %v1064 = vpow.pop %v1063
        %v1065 = vadd.f32 %v1064, 1.0
        %v1066 = vrcp.pop %v1065
        %v1067 = vmul.f32 1.0, %v1066
        %v1068 = vmul.f32 %v1060, %v955
        %v1069 = vmul.f32 %v1054, %v1061
        %v1070 = vadd.f32 %v1068, %v1069
        %v1071 = vtanh.pop %v1070
        %v1072 = vmul.f32 %v1067, %v1071
        %v1073 = vld [vmem:[#allocation2 + $0x60] sm:$0xff]
        %v1074 = vld [vmem:[#allocation2 + $0x68] sm:$0xff]
        %v1075 = vld [vmem:[#allocation2 + $0x70] sm:$0xff]
        %v1076 = vld [vmem:[#allocation2 + $0x78] sm:$0xff]
        %v1077 = vpack.c.bf16 %v1072, %v1072
        %1078 = vmatprep.subr.bf16.mxu0 %v670
        %1079 = vmatpush1.bf16.msra.mxu0 %v669
        %1080 = vmatprep.subr.bf16.mxu0 %v674
        %1081 = vmatpush1.bf16.msra.mxu0 %v673
        %1082 = vmatprep.subr.bf16.mxu0 %v678
        %1083 = vmatpush1.bf16.msra.mxu0 %v677
        %1084 = vmatprep.subr.bf16.mxu0 %v682
        %1085 = vmatpush1.bf16.msra.mxu0 %v681
        %1086 = vmatprep.subr.bf16.mxu0 %v686
        %1087 = vmatpush1.bf16.msra.mxu0 %v685
        %1088 = vmatprep.subr.bf16.mxu0 %v690
        %1089 = vmatpush1.bf16.msra.mxu0 %v689
        %1090 = vmatprep.subr.bf16.mxu0 %v694
        %1091 = vmatpush1.bf16.msra.mxu0 %v693
        %1092 = vmatprep.subr.bf16.mxu0 %v698
        %1093 = vmatpush1.bf16.msra.mxu0 %v697
        %1094 = vmatprep.subr.bf16.mxu0 0
        %1095 = vmatpush1.bf16.msra.mxu0 0
        %1096 = vmatprep.subr.bf16.mxu0 0
        %1097 = vmatpush1.bf16.msra.mxu0 0
        %1098 = vmatprep.subr.bf16.mxu0 0
        %1099 = vmatpush1.bf16.msra.mxu0 0
        %1100 = vmatprep.subr.bf16.mxu0 0
        %1101 = vmatpush1.bf16.msra.mxu0 0
        %1102 = vmatprep.subr.bf16.mxu0 0
        %1103 = vmatpush1.bf16.msra.mxu0 0
        %1104 = vmatprep.subr.bf16.mxu0 0
        %1105 = vmatpush1.bf16.msra.mxu0 0
        %1106 = vmatprep.subr.bf16.mxu0 0
        %1107 = vmatpush1.bf16.msra.mxu0 0
        %1108 = vmatprep.subr.bf16.mxu0 0
        %1109 = vmatpush1.bf16.msra.mxu0 0
        %1110 = vmatprep.mubr.bf16.mxu0 0
        %1111 = vmatmul.mubr.bf16.gmra.mrb[0].mxu0 %v1077
        %v1112 = vpop.f32.mrb[0].mxu0
        %v1113 = vadd.f32 0.0, %v1112
        %v1114 = vpop.f32.mrb[0].mxu0
        %v1115 = vadd.f32 0.0, %v1114
        %v1116 = vpop.f32.mrb[0].mxu0
        %v1117 = vpop.f32.mrb[0].mxu0
        %1118 = vdwg.mxu0
        %1119 = vmatprep.subr.bf16.mxu0 %v672
        %1120 = vmatpush1.bf16.msra.mxu0 %v671
        %1121 = vmatprep.subr.bf16.mxu0 %v676
        %1122 = vmatpush1.bf16.msra.mxu0 %v675
        %1123 = vmatprep.subr.bf16.mxu0 %v680
        %1124 = vmatpush1.bf16.msra.mxu0 %v679
        %1125 = vmatprep.subr.bf16.mxu0 %v684
        %1126 = vmatpush1.bf16.msra.mxu0 %v683
        %1127 = vmatprep.subr.bf16.mxu0 %v688
        %1128 = vmatpush1.bf16.msra.mxu0 %v687
        %1129 = vmatprep.subr.bf16.mxu0 %v692
        %1130 = vmatpush1.bf16.msra.mxu0 %v691
        %1131 = vmatprep.subr.bf16.mxu0 %v696
        %1132 = vmatpush1.bf16.msra.mxu0 %v695
        %1133 = vmatprep.subr.bf16.mxu0 %v700
        %1134 = vmatpush1.bf16.msra.mxu0 %v699
        %1135 = vmatprep.subr.bf16.mxu0 0
        %1136 = vmatpush1.bf16.msra.mxu0 0
        %1137 = vmatprep.subr.bf16.mxu0 0
        %1138 = vmatpush1.bf16.msra.mxu0 0
        %1139 = vmatprep.subr.bf16.mxu0 0
        %1140 = vmatpush1.bf16.msra.mxu0 0
        %1141 = vmatprep.subr.bf16.mxu0 0
        %1142 = vmatpush1.bf16.msra.mxu0 0
        %1143 = vmatprep.subr.bf16.mxu0 0
        %1144 = vmatpush1.bf16.msra.mxu0 0
        %1145 = vmatprep.subr.bf16.mxu0 0
        %1146 = vmatpush1.bf16.msra.mxu0 0
        %1147 = vmatprep.subr.bf16.mxu0 0
        %1148 = vmatpush1.bf16.msra.mxu0 0
        %1149 = vmatprep.subr.bf16.mxu0 0
        %1150 = vmatpush1.bf16.msra.mxu0 0
        %1151 = vmatprep.mubr.bf16.mxu0 0
        %1152 = vmatmul.mubr.bf16.gmra.mrb[0].mxu0 %v1077
        %v1153 = vpop.f32.mrb[0].mxu0
        %v1154 = vadd.f32 0.0, %v1153
        %v1155 = vpop.f32.mrb[0].mxu0
        %v1156 = vadd.f32 0.0, %v1155
        %v1157 = vpop.f32.mrb[0].mxu0
        %v1158 = vpop.f32.mrb[0].mxu0
        %1159 = vdwg.mxu0
        %v1160 = vadd.f32 %v1073, %v1113
        %v1161 = vadd.f32 %v1074, %v1115
        %v1162 = vadd.f32 %v1075, %v1154
        %v1163 = vadd.f32 %v1076, %v1156
        %v1164 = vxor.u32 %v1160, 2147483648
        %v1165 = vmul.f32 %v1164, 1.442695
        %v1166 = vpow.pop %v1165
        %v1167 = vadd.f32 %v1166, 1.0
        %v1168 = vrcp.pop %v1167
        %v1169 = vmul.f32 1.0, %v1168
        %v1170 = vxor.u32 %v1161, 2147483648
        %v1171 = vmul.f32 %v1170, 1.442695
        %v1172 = vpow.pop %v1171
        %v1173 = vadd.f32 %v1172, 1.0
        %v1174 = vrcp.pop %v1173
        %v1175 = vmul.f32 1.0, %v1174
        %v1176 = vtanh.pop %v1162
        %v1177 = vxor.u32 %v1163, 2147483648
        %v1178 = vmul.f32 %v1177, 1.442695
        %v1179 = vpow.pop %v1178
        %v1180 = vadd.f32 %v1179, 1.0
        %v1181 = vrcp.pop %v1180
        %v1182 = vmul.f32 1.0, %v1181
        %v1183 = vmul.f32 %v1175, %v1070
        %v1184 = vmul.f32 %v1169, %v1176
        %v1185 = vadd.f32 %v1183, %v1184
        %v1186 = vtanh.pop %v1185
        %v1187 = vmul.f32 %v1182, %v1186
        %1188 = vst [vmem:[#allocation3] sm:$0xff] %v1187
        %1189 = vst [vmem:[#allocation4] sm:$0xff] %v1185
        %p1190 = scmp.eq.s32.totalorder %s22, 1
        // Predicated region
        $region69: #{tpu_custom_call.1} parent=51 // pred_check
          %p1191 = pneg %p1190
        $region70: #{tpu_custom_call.1} parent=51 // pred_check_branch
          %1193 = sbr.rel (%p1191) target = $region72
        $region71: #{tpu_custom_call.1} parent=51 // pred_region
          %v1194 = vmax.f32 %v1187, 0.0
          %v1195 = vpack.c.bf16 %v1194, %v1194
          %v1196 = vld [vmem:[#allocation8] sm:$0xf]
          %v1197 = vld [vmem:[#allocation8 + $0x4] sm:$0xf]
          %v1198 = vld [vmem:[#allocation8 + $0x8] sm:$0xf]
          %v1199 = vld [vmem:[#allocation8 + $0xc] sm:$0xf]
          %v1200 = vld [vmem:[#allocation8 + $0x10] sm:$0xf]
          %v1201 = vld [vmem:[#allocation8 + $0x14] sm:$0xf]
          %v1202 = vld [vmem:[#allocation8 + $0x18] sm:$0xf]
          %v1203 = vld [vmem:[#allocation8 + $0x1c] sm:$0xf]
          %v1204 = vld [vmem:[#allocation8 + $0x20] sm:$0xf]
          %v1205 = vld [vmem:[#allocation8 + $0x24] sm:$0xf]
          %v1206 = vld [vmem:[#allocation8 + $0x28] sm:$0xf]
          %v1207 = vld [vmem:[#allocation8 + $0x2c] sm:$0xf]
          %v1208 = vld [vmem:[#allocation8 + $0x30] sm:$0xf]
          %v1209 = vld [vmem:[#allocation8 + $0x34] sm:$0xf]
          %v1210 = vld [vmem:[#allocation8 + $0x38] sm:$0xf]
          %v1211 = vld [vmem:[#allocation8 + $0x3c] sm:$0xf]
          %v1212 = vld [vmem:[%s5] sm:$0x1]
          %v1214 = vlaneseq
          %v1215 = vshrl.u32 %v1214, 7
          %v1216 = vsub.s32 0, %v1215
          %v1217 = vrot.slane %v1212, %v1216
          %v1235 = vunpack.c.l.b16 %v1196
          %v1236 = vunpack.c.l.b16 %v1197
          %v1237 = vunpack.c.l.b16 %v1198
          %v1238 = vunpack.c.l.b16 %v1199
          %v1239 = vunpack.c.l.b16 %v1200
          %v1240 = vunpack.c.l.b16 %v1201
          %v1241 = vunpack.c.l.b16 %v1202
          %v1242 = vunpack.c.l.b16 %v1203
          %v1243 = vunpack.c.l.b16 %v1204
          %v1244 = vunpack.c.l.b16 %v1205
          %v1245 = vunpack.c.l.b16 %v1206
          %v1246 = vunpack.c.l.b16 %v1207
          %v1247 = vunpack.c.l.b16 %v1208
          %v1248 = vunpack.c.l.b16 %v1209
          %v1249 = vunpack.c.l.b16 %v1210
          %v1250 = vunpack.c.l.b16 %v1211
          %v1251 = vpack.c.b16 %v1236, %v1235
          %v1252 = vpack.c.b16 %v1238, %v1237
          %v1253 = vpack.c.b16 %v1240, %v1239
          %v1254 = vpack.c.b16 %v1242, %v1241
          %v1255 = vpack.c.b16 %v1244, %v1243
          %v1256 = vpack.c.b16 %v1246, %v1245
          %v1257 = vpack.c.b16 %v1248, %v1247
          %v1258 = vpack.c.b16 %v1250, %v1249
          %1267 = vmatprep.subr.bf16.mxu0 0
          %1268 = vmatpush1.bf16.msra.mxu0 %v1251
          %1269 = vmatprep.subr.bf16.mxu0 0
          %1270 = vmatpush1.bf16.msra.mxu0 %v1252
          %1271 = vmatprep.subr.bf16.mxu0 0
          %1272 = vmatpush1.bf16.msra.mxu0 %v1253
          %1273 = vmatprep.subr.bf16.mxu0 0
          %1274 = vmatpush1.bf16.msra.mxu0 %v1254
          %1275 = vmatprep.subr.bf16.mxu0 0
          %1276 = vmatpush1.bf16.msra.mxu0 %v1255
          %1277 = vmatprep.subr.bf16.mxu0 0
          %1278 = vmatpush1.bf16.msra.mxu0 %v1256
          %1279 = vmatprep.subr.bf16.mxu0 0
          %1280 = vmatpush1.bf16.msra.mxu0 %v1257
          %1281 = vmatprep.subr.bf16.mxu0 0
          %1282 = vmatpush1.bf16.msra.mxu0 %v1258
          %1283 = vmatprep.subr.bf16.mxu0 0
          %1284 = vmatpush1.bf16.msra.mxu0 0
          %1285 = vmatprep.subr.bf16.mxu0 0
          %1286 = vmatpush1.bf16.msra.mxu0 0
          %1287 = vmatprep.subr.bf16.mxu0 0
          %1288 = vmatpush1.bf16.msra.mxu0 0
          %1289 = vmatprep.subr.bf16.mxu0 0
          %1290 = vmatpush1.bf16.msra.mxu0 0
          %1291 = vmatprep.subr.bf16.mxu0 0
          %1292 = vmatpush1.bf16.msra.mxu0 0
          %1293 = vmatprep.subr.bf16.mxu0 0
          %1294 = vmatpush1.bf16.msra.mxu0 0
          %1295 = vmatprep.subr.bf16.mxu0 0
          %1296 = vmatpush1.bf16.msra.mxu0 0
          %1297 = vmatprep.subr.bf16.mxu0 0
          %1298 = vmatpush1.bf16.msra.mxu0 0
          %1299 = vmatprep.mubr.bf16.mxu0 0
          %1300 = vmatmul.mubr.bf16.gmra.mrb[0].mxu0 %v1195
          %v1301 = vpop.f32.mrb[0].mxu0
          %v1302 = vadd.f32 %v1217, %v1301
          %v1303 = vpop.f32.mrb[0].mxu0
          %v1304 = vpop.f32.mrb[0].mxu0
          %v1305 = vpop.f32.mrb[0].mxu0
          %1306 = vdwg.mxu0
          %v1307 = vmax.f32 %v1302, 0.0
          %v1308 = vpack.c.bf16 %v1307, %v1307
          %v1309 = vld [vmem:[#allocation10] sm:$0xf]
          %v1310 = vld [vmem:[#allocation10 + $0x4] sm:$0xf]
          %v1311 = vld [vmem:[#allocation10 + $0x8] sm:$0xf]
          %v1312 = vld [vmem:[#allocation10 + $0xc] sm:$0xf]
          %v1313 = vld [vmem:[#allocation10 + $0x10] sm:$0xf]
          %v1314 = vld [vmem:[#allocation10 + $0x14] sm:$0xf]
          %v1315 = vld [vmem:[#allocation10 + $0x18] sm:$0xf]
          %v1316 = vld [vmem:[#allocation10 + $0x1c] sm:$0xf]
          %v1317 = vld [vmem:[#allocation10 + $0x20] sm:$0xf]
          %v1318 = vld [vmem:[#allocation10 + $0x24] sm:$0xf]
          %v1319 = vld [vmem:[#allocation10 + $0x28] sm:$0xf]
          %v1320 = vld [vmem:[#allocation10 + $0x2c] sm:$0xf]
          %v1321 = vld [vmem:[#allocation10 + $0x30] sm:$0xf]
          %v1322 = vld [vmem:[#allocation10 + $0x34] sm:$0xf]
          %v1323 = vld [vmem:[#allocation10 + $0x38] sm:$0xf]
          %v1324 = vld [vmem:[#allocation10 + $0x3c] sm:$0xf]
          %v1325 = vld [vmem:[%s7] sm:$0x1]
          %v1327 = vlaneseq
          %v1328 = vshrl.u32 %v1327, 7
          %v1329 = vsub.s32 0, %v1328
          %v1330 = vrot.slane %v1325, %v1329
          %v1348 = vunpack.c.l.b16 %v1309
          %v1349 = vunpack.c.l.b16 %v1310
          %v1350 = vunpack.c.l.b16 %v1311
          %v1351 = vunpack.c.l.b16 %v1312
          %v1352 = vunpack.c.l.b16 %v1313
          %v1353 = vunpack.c.l.b16 %v1314
          %v1354 = vunpack.c.l.b16 %v1315
          %v1355 = vunpack.c.l.b16 %v1316
          %v1356 = vunpack.c.l.b16 %v1317
          %v1357 = vunpack.c.l.b16 %v1318
          %v1358 = vunpack.c.l.b16 %v1319
          %v1359 = vunpack.c.l.b16 %v1320
          %v1360 = vunpack.c.l.b16 %v1321
          %v1361 = vunpack.c.l.b16 %v1322
          %v1362 = vunpack.c.l.b16 %v1323
          %v1363 = vunpack.c.l.b16 %v1324
          %v1364 = vpack.c.b16 %v1349, %v1348
          %v1365 = vpack.c.b16 %v1351, %v1350
          %v1366 = vpack.c.b16 %v1353, %v1352
          %v1367 = vpack.c.b16 %v1355, %v1354
          %v1368 = vpack.c.b16 %v1357, %v1356
          %v1369 = vpack.c.b16 %v1359, %v1358
          %v1370 = vpack.c.b16 %v1361, %v1360
          %v1371 = vpack.c.b16 %v1363, %v1362
          %1380 = vmatprep.subr.bf16.mxu0 0
          %1381 = vmatpush1.bf16.msra.mxu0 %v1364
          %1382 = vmatprep.subr.bf16.mxu0 0
          %1383 = vmatpush1.bf16.msra.mxu0 %v1365
          %1384 = vmatprep.subr.bf16.mxu0 0
          %1385 = vmatpush1.bf16.msra.mxu0 %v1366
          %1386 = vmatprep.subr.bf16.mxu0 0
          %1387 = vmatpush1.bf16.msra.mxu0 %v1367
          %1388 = vmatprep.subr.bf16.mxu0 0
          %1389 = vmatpush1.bf16.msra.mxu0 %v1368
          %1390 = vmatprep.subr.bf16.mxu0 0
          %1391 = vmatpush1.bf16.msra.mxu0 %v1369
          %1392 = vmatprep.subr.bf16.mxu0 0
          %1393 = vmatpush1.bf16.msra.mxu0 %v1370
          %1394 = vmatprep.subr.bf16.mxu0 0
          %1395 = vmatpush1.bf16.msra.mxu0 %v1371
          %1396 = vmatprep.subr.bf16.mxu0 0
          %1397 = vmatpush1.bf16.msra.mxu0 0
          %1398 = vmatprep.subr.bf16.mxu0 0
          %1399 = vmatpush1.bf16.msra.mxu0 0
          %1400 = vmatprep.subr.bf16.mxu0 0
          %1401 = vmatpush1.bf16.msra.mxu0 0
          %1402 = vmatprep.subr.bf16.mxu0 0
          %1403 = vmatpush1.bf16.msra.mxu0 0
          %1404 = vmatprep.subr.bf16.mxu0 0
          %1405 = vmatpush1.bf16.msra.mxu0 0
          %1406 = vmatprep.subr.bf16.mxu0 0
          %1407 = vmatpush1.bf16.msra.mxu0 0
          %1408 = vmatprep.subr.bf16.mxu0 0
          %1409 = vmatpush1.bf16.msra.mxu0 0
          %1410 = vmatprep.subr.bf16.mxu0 0
          %1411 = vmatpush1.bf16.msra.mxu0 0
          %1412 = vmatprep.mubr.bf16.mxu0 0
          %1413 = vmatmul.mubr.bf16.gmra.mrb[0].mxu0 %v1308
          %v1414 = vpop.f32.mrb[0].mxu0
          %v1415 = vadd.f32 %v1330, %v1414
          %v1416 = vpop.f32.mrb[0].mxu0
          %v1417 = vpop.f32.mrb[0].mxu0
          %v1418 = vpop.f32.mrb[0].mxu0
          %1419 = vdwg.mxu0
          %1420 = vst [vmem:[#allocation11] sm:$0xff] %v1415
        $region72: #{tpu_custom_call.1} parent=51 // pred_fallthru
          _
        // Predicated region
        $region73: #{tpu_custom_call.1} parent=51 // pred_check
          %p1421 = pneg %p208
        $region74: #{tpu_custom_call.1} parent=51 // pred_check_branch
          %1423 = sbr.rel (%p1421) target = $region76
        $region75: #{tpu_custom_call.1} parent=51 // pred_region
          %s1425 = ssub.s32 128, 128
          %1426 = vsyncadd [#allocation7], %s1425
          %s1428 = sshll.u32 [#allocation11], 4
          %s1429 = int_to_ptr.vmem [resolvable:$true] %s1428
          %1431 = dma.vmem_to_hbm [thread:$0]  %s1429, 128, %s8, [#allocation7]
        $region76: #{tpu_custom_call.1} parent=51 // pred_fallthru
          _
        // Predicated region
        $region77: #{tpu_custom_call.1} parent=51 // pred_check
          %p1432 = pneg %p208
        $region78: #{tpu_custom_call.1} parent=51 // pred_check_branch
          %1434 = sbr.rel (%p1432) target = $region80
        $region79: #{tpu_custom_call.1} parent=51 // pred_region
          %1435 = dma.done [#allocation7], 128
        $region80: #{tpu_custom_call.1} parent=51 // pred_fallthru
          _
      $region52: #{tpu_custom_call.1} parent=5 // pred_fallthru
        _
      %p1436 = scmp.le.s32.totalorder 2, %s17
      // Predicated region
      $region81: #{tpu_custom_call.1} parent=5 // pred_check
        %p1437 = pneg %p1436
      $region82: #{tpu_custom_call.1} parent=5 // pred_check_branch
        %1439 = sbr.rel (%p1437) target = $region84
      $region83: #{tpu_custom_call.1} parent=5 // pred_region
        %s1440 = ssub.s32 %s17, 2
      $region84: #{tpu_custom_call.1} parent=5 // pred_fallthru
        _
    $region6: #{tpu_custom_call.1} parent=1 // loop_footer
      %s21 = sadd.s32 1, %s17
    $region7: #{tpu_custom_call.1} parent=1 // loop_footer_branch
      %16 = sbr.rel target = $region3
    $region8: #{tpu_custom_call.1} parent=1 // loop_exit
      _
    %1441 = vsyncpa [#allocation6], 1
    %s1442 = scalar_lea.sflag [#allocation6], 1
    %1443 = vsyncpa %s1442, 1
    %1444 = vsyncpa [#allocation9], 1
    %1445 = vsyncpa [#allocation7], 1
    %s1446 = scalar_lea.sflag [#allocation7], 1
    %1447 = vsyncpa %s1446, 1

</llo_original>
